<compile_context>
chip_gen: v5e
topology: v5e:2x2
jax: 0.10.0
libtpu: 0.0.40
codegen_flags: <defaults>
</compile_context>

<pallas_src>
import jax
import jax.numpy as jnp
from jax.experimental import pallas as pl
from jax.experimental.pallas import tpu as pltpu

NUM_BLOCKS = 2
NUM_HEADS = 4
LN_EPS = 1e-8  # matches nn.LayerNorm(embed_dim, eps=1e-08) in the reference


def _layernorm(x, g, b, eps=LN_EPS):
    mu = jnp.mean(x, axis=-1, keepdims=True)
    xc = x - mu
    var = jnp.mean(xc * xc, axis=-1, keepdims=True)
    return xc * jax.lax.rsqrt(var + eps) * g + b


def sasrec_kernel(seqs_ref, tmask_ref, item_ref,
                  aln_g_ref, aln_b_ref,
                  wq_ref, bq_ref, wkv_ref, bkv_ref,
                  wo_ref, bo_ref,
                  fln_g_ref, fln_b_ref,
                  c1w_ref, c1b_ref, c2w_ref, c2b_ref,
                  lln_g_ref, lln_b_ref,
                  logits_ref):
    BB, L, D = seqs_ref.shape
    H = NUM_HEADS
    Dh = D // H
    N = BB * L

    tm3 = tmask_ref[...]                          # (BB, L, 1) timeline mask (0/1)
    tm2 = tm3.reshape(N, 1)                       # (N, 1)
    x = seqs_ref[...].reshape(N, D) * tm2         # (N, D) f32

    # Additive causal mask, built once per grid step (0 allowed / -1e30 masked).
    row = jax.lax.broadcasted_iota(jnp.int32, (L, L), 0)
    col = jax.lax.broadcasted_iota(jnp.int32, (L, L), 1)
    causal_add = jnp.where(col <= row, 0.0, -1e30).astype(jnp.float32)[None]  # (1, L, L)

    for i in range(NUM_BLOCKS):
        # ---- self-attention block: Q = LN(seqs), K = V = seqs ----
        q_in = _layernorm(x, aln_g_ref[i], aln_b_ref[i])                      # (N, D)

        # Fused projections (bf16 MXU operands, f32 accumulate).
        # 1/sqrt(Dh) is pre-folded into wq / bq in the wrapper.
        q_full = jnp.dot(q_in.astype(jnp.bfloat16), wq_ref[i],
                         preferred_element_type=jnp.float32) + bq_ref[i]      # (N, D)
        kv = jnp.dot(x.astype(jnp.bfloat16), wkv_ref[i],
                     preferred_element_type=jnp.float32) + bkv_ref[i]         # (N, 2D)

        q3 = q_full.reshape(BB, L, D).astype(jnp.bfloat16)
        kv3 = kv.reshape(BB, L, 2 * D).astype(jnp.bfloat16)

        heads = []
        for h in range(H):
            qh = q3[:, :, h * Dh:(h + 1) * Dh]                                # (BB, L, Dh)
            kh = kv3[:, :, h * Dh:(h + 1) * Dh]                               # (BB, L, Dh)
            vh = kv3[:, :, D + h * Dh:D + (h + 1) * Dh]                       # (BB, L, Dh)
            # Scores: batched over BB rows in one MXU call.
            s = jax.lax.dot_general(qh, kh, (((2,), (2,)), ((0,), (0,))),
                                    preferred_element_type=jnp.float32)       # (BB, L, L)
            s = s + causal_add
            s = s - jnp.max(s, axis=-1, keepdims=True)
            p = jnp.exp(s)
            p = p * pl.reciprocal(jnp.sum(p, axis=-1, keepdims=True), approx=True)
            heads.append(jax.lax.dot_general(p.astype(jnp.bfloat16), vh,
                                             (((2,), (1,)), ((0,), (0,))),
                                             preferred_element_type=jnp.float32))  # (BB, L, Dh)

        # Lane-concat head outputs, ONE full-width output projection.
        o_cat = jnp.concatenate(heads, axis=-1).reshape(N, D)                 # (N, D)
        mha = jnp.dot(o_cat.astype(jnp.bfloat16), wo_ref[i],
                      preferred_element_type=jnp.float32) + bo_ref[i]         # (N, D)
        x = q_in + mha

        # ---- point-wise feed-forward (Conv1d k=1 == matmul) with residual ----
        x = _layernorm(x, fln_g_ref[i], fln_b_ref[i])
        h1 = jnp.maximum(
            jnp.dot(x.astype(jnp.bfloat16), c1w_ref[i],
                    preferred_element_type=jnp.float32) + c1b_ref[i], 0.0)
        ff = jnp.dot(h1.astype(jnp.bfloat16), c2w_ref[i],
                     preferred_element_type=jnp.float32) + c2b_ref[i]
        x = (x + ff) * tm2

    feats = _layernorm(x, lln_g_ref[...], lln_b_ref[...])                     # (N, D)

    # masked mean pooling over the sequence, then dot with the target item embedding
    feats3 = feats.reshape(BB, L, D) * tm3                                    # (BB, L, D)
    num = jnp.sum(feats3, axis=1)                                             # (BB, D)
    denom = jnp.sum(tm3, axis=1)                                              # (BB, 1)
    user = num / denom
    user = jnp.where(jnp.isnan(user), 0.0, user)
    logits = jnp.sum(user * item_ref[...], axis=-1, keepdims=True)            # (BB, 1)
    logits_ref[...] = logits.reshape(BB, 1, 1)


def init_params(key, item_num, maxlen, embed_dim):
    D = embed_dim
    scale = 0.02
    keys = jax.random.split(key, 2 + NUM_BLOCKS)
    params = {
        'item_emb': scale * jax.random.normal(keys[0], (item_num, D), jnp.float32),
        'pos_emb': scale * jax.random.normal(keys[1], (maxlen, D), jnp.float32),
        'blocks': [],
        'lln_g': jnp.ones((D,), jnp.float32),
        'lln_b': jnp.zeros((D,), jnp.float32),
    }
    for bi in range(NUM_BLOCKS):
        kb = jax.random.split(keys[2 + bi], 6)
        params['blocks'].append(dict(
            aln_g=jnp.ones((D,), jnp.float32), aln_b=jnp.zeros((D,), jnp.float32),
            in_w=scale * jax.random.normal(kb[0], (3 * D, D), jnp.float32),
            in_b=0.01 * jax.random.normal(kb[1], (3 * D,), jnp.float32),
            out_w=scale * jax.random.normal(kb[2], (D, D), jnp.float32),
            out_b=jnp.zeros((D,), jnp.float32),
            fln_g=jnp.ones((D,), jnp.float32), fln_b=jnp.zeros((D,), jnp.float32),
            c1_w=scale * jax.random.normal(kb[3], (D, D), jnp.float32),  # Conv1d k=1 squeezed
            c1_b=jnp.zeros((D,), jnp.float32),
            c2_w=scale * jax.random.normal(kb[4], (D, D), jnp.float32),
            c2_b=0.01 * jax.random.normal(kb[5], (D,), jnp.float32),
        ))
    return params


def sasrec_forward(params, user_id, target_item_id, history_item_id, history_len,
                   user_features=None, item_features=None, batch_tile=8):
    # user_id / user_features / item_features are unused by SASRec.forward.
    item_emb = params['item_emb']
    pos_emb = params['pos_emb']
    B, L = history_item_id.shape
    D = item_emb.shape[1]
    Dh = D // NUM_HEADS
    qk_scale = 1.0 / (Dh ** 0.5)

    # ---- glue (embedding gathers) in plain JAX ----
    seqs = (item_emb[history_item_id] * (D ** 0.5)
            + pos_emb[jnp.arange(L)][None, :, :]).astype(jnp.float32)        # (B, L, D)
    tmask = history_len.astype(jnp.float32)[..., None]                       # (B, L, 1)
    tgt = item_emb[target_item_id[:, 0]].astype(jnp.float32)                 # (B, D)

    # ---- batch tiling (BB rows per grid step) ----
    BB = min(batch_tile, B)
    n_tiles = -(-B // BB)
    B_pad = n_tiles * BB
    if B_pad != B:
        pad = B_pad - B
        seqs = jnp.pad(seqs, ((0, pad), (0, 0), (0, 0)))
        tmask = jnp.pad(tmask, ((0, pad), (0, 0), (0, 0)))
        tgt = jnp.pad(tgt, ((0, pad), (0, 0)))

    blocks = params['blocks']

    def stack(fn):
        return jnp.stack([fn(blk) for blk in blocks])

    # Fused projections. torch in_proj_weight is (3D, D): rows [Q | K | V];
    # y = x @ W.T, so pre-transpose. Fold 1/sqrt(Dh) into the Q weights/bias.
    aln_g = stack(lambda b: b['aln_g'][None, :])                             # (NB, 1, D)
    aln_b = stack(lambda b: b['aln_b'][None, :])
    wq = stack(lambda b: b['in_w'][:D].T * qk_scale).astype(jnp.bfloat16)    # (NB, D, D)
    bq = stack(lambda b: (b['in_b'][:D] * qk_scale)[None, :])                # (NB, 1, D)
    wkv = stack(lambda b: b['in_w'][D:].T).astype(jnp.bfloat16)              # (NB, D, 2D) [K|V]
    bkv = stack(lambda b: b['in_b'][D:][None, :])                            # (NB, 1, 2D)
    wo = stack(lambda b: b['out_w'].T).astype(jnp.bfloat16)                  # (NB, D, D)
    bo = stack(lambda b: b['out_b'][None, :])                                # (NB, 1, D)
    fln_g = stack(lambda b: b['fln_g'][None, :])
    fln_b = stack(lambda b: b['fln_b'][None, :])
    c1w = stack(lambda b: b['c1_w'].T).astype(jnp.bfloat16)                  # (NB, D, D)
    c1b = stack(lambda b: b['c1_b'][None, :])
    c2w = stack(lambda b: b['c2_w'].T).astype(jnp.bfloat16)
    c2b = stack(lambda b: b['c2_b'][None, :])
    lln_g = params['lln_g'][None, :]                                         # (1, D)
    lln_b = params['lln_b'][None, :]

    weights = [aln_g, aln_b, wq, bq, wkv, bkv, wo, bo,
               fln_g, fln_b, c1w, c1b, c2w, c2b, lln_g, lln_b]

    def batch_spec(block_shape):
        nd = len(block_shape)
        return pl.BlockSpec(block_shape, lambda t, nd=nd: (t,) + (0,) * (nd - 1))

    def resident_spec(arr):
        nd = arr.ndim
        return pl.BlockSpec(arr.shape, lambda t, nd=nd: (0,) * nd)

    in_specs = ([batch_spec((BB, L, D)),        # seqs
                 batch_spec((BB, L, 1)),        # timeline mask
                 batch_spec((BB, D))]           # target item embedding
                + [resident_spec(w) for w in weights])

    logits = pl.pallas_call(
        sasrec_kernel,
        out_shape=jax.ShapeDtypeStruct((B_pad, 1, 1), jnp.float32),
        grid=(n_tiles,),
        in_specs=in_specs,
        out_specs=pl.BlockSpec((BB, 1, 1), lambda t: (t, 0, 0)),
        compiler_params=pltpu.CompilerParams(
            dimension_semantics=("parallel",)),
    )(seqs, tmask, tgt, *weights)
    return logits.reshape(B_pad, 1)[:B]


if __name__ == "__main__":
    config = {
        'embed_dim': 32,
        'maxlen': 8,
        'dim_config': {'user_id': 10, 'item_id': 100},
    }
    B = 2
    D = config['embed_dim']
    L = config['maxlen']
    item_num = config['dim_config']['item_id']

    params = init_params(jax.random.PRNGKey(0), item_num, L, D)

    kd = jax.random.split(jax.random.PRNGKey(0), 4)
    history_item_id = jax.random.randint(kd[1], (B, L), 0, item_num, dtype=jnp.int32)
    # history_len is used by the model as a per-position 0/1 mask
    history_len = jnp.array([[1, 1, 1, 1, 1, 0, 0, 0],
                             [1, 1, 1, 1, 1, 1, 1, 1]], dtype=jnp.float32)
    target_item_id = jax.random.randint(kd[2], (B, 1), 0, item_num, dtype=jnp.int32)
    user_id = jnp.arange(B, dtype=jnp.int32)

    logits = sasrec_forward(params, user_id, target_item_id,
                            history_item_id, history_len)
    jax.block_until_ready(logits)
    assert logits.shape == (B, 1) and logits.dtype == jnp.float32
    print("KERNEL_OK")
</pallas_src>

<mosaic_0001>
module attributes {stable_mosaic.version = 11 : i64} {
  func.func @sasrec_kernel(%arg0: i32, %arg1: memref<2x8x32xf32, #tpu.memory_space<vmem>>, %arg2: memref<2x8x1xf32, #tpu.memory_space<vmem>>, %arg3: memref<2x32xf32, #tpu.memory_space<vmem>>, %arg4: memref<2x1x32xf32, #tpu.memory_space<vmem>>, %arg5: memref<2x1x32xf32, #tpu.memory_space<vmem>>, %arg6: memref<2x32x32xbf16, #tpu.memory_space<vmem>>, %arg7: memref<2x1x32xf32, #tpu.memory_space<vmem>>, %arg8: memref<2x32x64xbf16, #tpu.memory_space<vmem>>, %arg9: memref<2x1x64xf32, #tpu.memory_space<vmem>>, %arg10: memref<2x32x32xbf16, #tpu.memory_space<vmem>>, %arg11: memref<2x1x32xf32, #tpu.memory_space<vmem>>, %arg12: memref<2x1x32xf32, #tpu.memory_space<vmem>>, %arg13: memref<2x1x32xf32, #tpu.memory_space<vmem>>, %arg14: memref<2x32x32xbf16, #tpu.memory_space<vmem>>, %arg15: memref<2x1x32xf32, #tpu.memory_space<vmem>>, %arg16: memref<2x32x32xbf16, #tpu.memory_space<vmem>>, %arg17: memref<2x1x32xf32, #tpu.memory_space<vmem>>, %arg18: memref<1x32xf32, #tpu.memory_space<vmem>>, %arg19: memref<1x32xf32, #tpu.memory_space<vmem>>, %arg20: memref<2x1x1xf32, #tpu.memory_space<vmem>>) attributes {dimension_semantics = [#tpu.dimension_semantics<parallel>], iteration_bounds = array<i64: 1>, scalar_prefetch = 0 : i64, scratch_operands = 0 : i64, tpu.core_type = #tpu.core_type<tc>, window_params = [{transform_indices = @transform_0, window_bounds = array<i64: 2, 8, 32>}, {transform_indices = @transform_1, window_bounds = array<i64: 2, 8, 1>}, {transform_indices = @transform_2, window_bounds = array<i64: 2, 32>}, {pipeline_mode = #tpu.pipeline_mode<synchronous>, transform_indices = @transform_3, window_bounds = array<i64: 2, 1, 32>}, {pipeline_mode = #tpu.pipeline_mode<synchronous>, transform_indices = @transform_4, window_bounds = array<i64: 2, 1, 32>}, {pipeline_mode = #tpu.pipeline_mode<synchronous>, transform_indices = @transform_5, window_bounds = array<i64: 2, 32, 32>}, {pipeline_mode = #tpu.pipeline_mode<synchronous>, transform_indices = @transform_6, window_bounds = array<i64: 2, 1, 32>}, {pipeline_mode = #tpu.pipeline_mode<synchronous>, transform_indices = @transform_7, window_bounds = array<i64: 2, 32, 64>}, {pipeline_mode = #tpu.pipeline_mode<synchronous>, transform_indices = @transform_8, window_bounds = array<i64: 2, 1, 64>}, {pipeline_mode = #tpu.pipeline_mode<synchronous>, transform_indices = @transform_9, window_bounds = array<i64: 2, 32, 32>}, {pipeline_mode = #tpu.pipeline_mode<synchronous>, transform_indices = @transform_10, window_bounds = array<i64: 2, 1, 32>}, {pipeline_mode = #tpu.pipeline_mode<synchronous>, transform_indices = @transform_11, window_bounds = array<i64: 2, 1, 32>}, {pipeline_mode = #tpu.pipeline_mode<synchronous>, transform_indices = @transform_12, window_bounds = array<i64: 2, 1, 32>}, {pipeline_mode = #tpu.pipeline_mode<synchronous>, transform_indices = @transform_13, window_bounds = array<i64: 2, 32, 32>}, {pipeline_mode = #tpu.pipeline_mode<synchronous>, transform_indices = @transform_14, window_bounds = array<i64: 2, 1, 32>}, {pipeline_mode = #tpu.pipeline_mode<synchronous>, transform_indices = @transform_15, window_bounds = array<i64: 2, 32, 32>}, {pipeline_mode = #tpu.pipeline_mode<synchronous>, transform_indices = @transform_16, window_bounds = array<i64: 2, 1, 32>}, {pipeline_mode = #tpu.pipeline_mode<synchronous>, transform_indices = @transform_17, window_bounds = array<i64: 1, 32>}, {pipeline_mode = #tpu.pipeline_mode<synchronous>, transform_indices = @transform_18, window_bounds = array<i64: 1, 32>}, {transform_indices = @transform_19, window_bounds = array<i64: 2, 1, 1>}]} {
    %c0 = arith.constant 0 : index
    %c0_0 = arith.constant 0 : index
    %c0_1 = arith.constant 0 : index
    %0 = vector.load %arg2[%c0, %c0_0, %c0_1] : memref<2x8x1xf32, #tpu.memory_space<vmem>>, vector<2x8x1xf32>
    %1 = vector.shape_cast %0 : vector<2x8x1xf32> to vector<16x1xf32>
    %c0_2 = arith.constant 0 : index
    %c0_3 = arith.constant 0 : index
    %c0_4 = arith.constant 0 : index
    %2 = vector.load %arg1[%c0_2, %c0_3, %c0_4] : memref<2x8x32xf32, #tpu.memory_space<vmem>>, vector<2x8x32xf32>
    %3 = vector.shape_cast %2 : vector<2x8x32xf32> to vector<16x32xf32>
    %4 = vector.broadcast %1 : vector<16x1xf32> to vector<16x32xf32>
    %5 = arith.mulf %3, %4 : vector<16x32xf32>
    %6 = tpu.iota {dimensions = array<i32: 0>} : vector<8x8xi32>
    %7 = tpu.iota {dimensions = array<i32: 1>} : vector<8x8xi32>
    %8 = arith.cmpi sle, %7, %6 : vector<8x8xi32>
    %cst = arith.constant 0.000000e+00 : f32
    %cst_5 = arith.constant -1.000000e+30 : f32
    %9 = vector.broadcast %cst : f32 to vector<8x8xf32>
    %10 = vector.broadcast %cst_5 : f32 to vector<8x8xf32>
    %11 = arith.select %8, %9, %10 : vector<8x8xi1>, vector<8x8xf32>
    %12 = vector.shape_cast %11 : vector<8x8xf32> to vector<1x8x8xf32>
    %c0_6 = arith.constant 0 : index
    %c0_7 = arith.constant 0 : index
    %c0_8 = arith.constant 0 : index
    %13 = vector.load %arg4[%c0_6, %c0_7, %c0_8] : memref<2x1x32xf32, #tpu.memory_space<vmem>>, vector<1x1x32xf32>
    %14 = vector.shape_cast %13 : vector<1x1x32xf32> to vector<1x32xf32>
    %c0_9 = arith.constant 0 : index
    %c0_10 = arith.constant 0 : index
    %c0_11 = arith.constant 0 : index
    %15 = vector.load %arg5[%c0_9, %c0_10, %c0_11] : memref<2x1x32xf32, #tpu.memory_space<vmem>>, vector<1x1x32xf32>
    %16 = vector.shape_cast %15 : vector<1x1x32xf32> to vector<1x32xf32>
    %cst_12 = arith.constant dense<0.000000e+00> : vector<16xf32>
    %17 = vector.multi_reduction <add>, %5, %cst_12 [1] : vector<16x32xf32> to vector<16xf32>
    %18 = vector.shape_cast %17 : vector<16xf32> to vector<16x1xf32>
    %cst_13 = arith.constant 3.200000e+01 : f32
    %19 = vector.broadcast %cst_13 : f32 to vector<16x1xf32>
    %20 = arith.divf %18, %19 : vector<16x1xf32>
    %21 = vector.broadcast %20 : vector<16x1xf32> to vector<16x32xf32>
    %22 = arith.subf %5, %21 : vector<16x32xf32>
    %23 = arith.mulf %22, %22 : vector<16x32xf32>
    %cst_14 = arith.constant dense<0.000000e+00> : vector<16xf32>
    %24 = vector.multi_reduction <add>, %23, %cst_14 [1] : vector<16x32xf32> to vector<16xf32>
    %25 = vector.shape_cast %24 : vector<16xf32> to vector<16x1xf32>
    %cst_15 = arith.constant 3.200000e+01 : f32
    %26 = vector.broadcast %cst_15 : f32 to vector<16x1xf32>
    %27 = arith.divf %25, %26 : vector<16x1xf32>
    %cst_16 = arith.constant 9.99999993E-9 : f32
    %28 = vector.broadcast %cst_16 : f32 to vector<16x1xf32>
    %29 = arith.addf %27, %28 : vector<16x1xf32>
    %30 = math.rsqrt %29 : vector<16x1xf32>
    %31 = vector.broadcast %30 : vector<16x1xf32> to vector<16x32xf32>
    %32 = arith.mulf %22, %31 : vector<16x32xf32>
    %33 = vector.broadcast %14 : vector<1x32xf32> to vector<16x32xf32>
    %34 = arith.mulf %32, %33 : vector<16x32xf32>
    %35 = vector.broadcast %16 : vector<1x32xf32> to vector<16x32xf32>
    %36 = arith.addf %34, %35 : vector<16x32xf32>
    %37 = arith.truncf %36 : vector<16x32xf32> to vector<16x32xbf16>
    %c0_17 = arith.constant 0 : index
    %c0_18 = arith.constant 0 : index
    %c0_19 = arith.constant 0 : index
    %38 = vector.load %arg6[%c0_17, %c0_18, %c0_19] : memref<2x32x32xbf16, #tpu.memory_space<vmem>>, vector<1x32x32xbf16>
    %39 = vector.shape_cast %38 : vector<1x32x32xbf16> to vector<32x32xbf16>
    %cst_20 = arith.constant dense<0.000000e+00> : vector<16x32xf32>
    %40 = tpu.matmul %37, %39, %cst_20 {dimension_numbers = #tpu.dot_dimension_numbers<[1], [0], [0], [1], [0, 0, 1, 1], [], []>} : vector<16x32xbf16>, vector<32x32xbf16>, vector<16x32xf32> -> vector<16x32xf32>
    %c0_21 = arith.constant 0 : index
    %c0_22 = arith.constant 0 : index
    %c0_23 = arith.constant 0 : index
    %41 = vector.load %arg7[%c0_21, %c0_22, %c0_23] : memref<2x1x32xf32, #tpu.memory_space<vmem>>, vector<1x1x32xf32>
    %42 = vector.shape_cast %41 : vector<1x1x32xf32> to vector<1x32xf32>
    %43 = vector.broadcast %42 : vector<1x32xf32> to vector<16x32xf32>
    %44 = arith.addf %40, %43 : vector<16x32xf32>
    %45 = arith.truncf %5 : vector<16x32xf32> to vector<16x32xbf16>
    %c0_24 = arith.constant 0 : index
    %c0_25 = arith.constant 0 : index
    %c0_26 = arith.constant 0 : index
    %46 = vector.load %arg8[%c0_24, %c0_25, %c0_26] : memref<2x32x64xbf16, #tpu.memory_space<vmem>>, vector<1x32x64xbf16>
    %47 = vector.shape_cast %46 : vector<1x32x64xbf16> to vector<32x64xbf16>
    %cst_27 = arith.constant dense<0.000000e+00> : vector<16x64xf32>
    %48 = tpu.matmul %45, %47, %cst_27 {dimension_numbers = #tpu.dot_dimension_numbers<[1], [0], [0], [1], [0, 0, 1, 1], [], []>} : vector<16x32xbf16>, vector<32x64xbf16>, vector<16x64xf32> -> vector<16x64xf32>
    %c0_28 = arith.constant 0 : index
    %c0_29 = arith.constant 0 : index
    %c0_30 = arith.constant 0 : index
    %49 = vector.load %arg9[%c0_28, %c0_29, %c0_30] : memref<2x1x64xf32, #tpu.memory_space<vmem>>, vector<1x1x64xf32>
    %50 = vector.shape_cast %49 : vector<1x1x64xf32> to vector<1x64xf32>
    %51 = vector.broadcast %50 : vector<1x64xf32> to vector<16x64xf32>
    %52 = arith.addf %48, %51 : vector<16x64xf32>
    %53 = vector.shape_cast %44 : vector<16x32xf32> to vector<2x8x32xf32>
    %54 = arith.truncf %53 : vector<2x8x32xf32> to vector<2x8x32xbf16>
    %55 = vector.shape_cast %52 : vector<16x64xf32> to vector<2x8x64xf32>
    %56 = arith.truncf %55 : vector<2x8x64xf32> to vector<2x8x64xbf16>
    %57 = vector.extract_strided_slice %54 {offsets = [0, 0, 0], sizes = [2, 8, 8], strides = [1, 1, 1]} : vector<2x8x32xbf16> to vector<2x8x8xbf16>
    %58 = vector.extract_strided_slice %56 {offsets = [0, 0, 0], sizes = [2, 8, 8], strides = [1, 1, 1]} : vector<2x8x64xbf16> to vector<2x8x8xbf16>
    %59 = vector.extract_strided_slice %56 {offsets = [0, 0, 32], sizes = [2, 8, 8], strides = [1, 1, 1]} : vector<2x8x64xbf16> to vector<2x8x8xbf16>
    %cst_31 = arith.constant dense<0.000000e+00> : vector<2x8x8xf32>
    %60 = tpu.matmul %57, %58, %cst_31 {dimension_numbers = #tpu.dot_dimension_numbers<[2], [2], [1], [1], [0, 0, 0, 1, 1, 1], [0], [0]>} : vector<2x8x8xbf16>, vector<2x8x8xbf16>, vector<2x8x8xf32> -> vector<2x8x8xf32>
    %61 = vector.broadcast %12 : vector<1x8x8xf32> to vector<2x8x8xf32>
    %62 = arith.addf %60, %61 : vector<2x8x8xf32>
    %cst_32 = arith.constant dense<0xFF800000> : vector<2x8xf32>
    %63 = vector.multi_reduction <maximumf>, %62, %cst_32 [2] : vector<2x8x8xf32> to vector<2x8xf32>
    %64 = vector.shape_cast %63 : vector<2x8xf32> to vector<2x8x1xf32>
    %65 = vector.broadcast %64 : vector<2x8x1xf32> to vector<2x8x8xf32>
    %66 = arith.subf %62, %65 : vector<2x8x8xf32>
    %67 = math.exp %66 : vector<2x8x8xf32>
    %cst_33 = arith.constant dense<0.000000e+00> : vector<2x8xf32>
    %68 = vector.multi_reduction <add>, %67, %cst_33 [2] : vector<2x8x8xf32> to vector<2x8xf32>
    %69 = vector.shape_cast %68 : vector<2x8xf32> to vector<2x8x1xf32>
    %70 = tpu.reciprocal %69 {approx = true} : vector<2x8x1xf32> -> vector<2x8x1xf32>
    %71 = vector.broadcast %70 : vector<2x8x1xf32> to vector<2x8x8xf32>
    %72 = arith.mulf %67, %71 : vector<2x8x8xf32>
    %73 = arith.truncf %72 : vector<2x8x8xf32> to vector<2x8x8xbf16>
    %cst_34 = arith.constant dense<0.000000e+00> : vector<2x8x8xf32>
    %74 = tpu.matmul %73, %59, %cst_34 {dimension_numbers = #tpu.dot_dimension_numbers<[2], [1], [1], [2], [0, 0, 0, 1, 1, 2], [0], [0]>} : vector<2x8x8xbf16>, vector<2x8x8xbf16>, vector<2x8x8xf32> -> vector<2x8x8xf32>
    %75 = vector.extract_strided_slice %54 {offsets = [0, 0, 8], sizes = [2, 8, 8], strides = [1, 1, 1]} : vector<2x8x32xbf16> to vector<2x8x8xbf16>
    %76 = vector.extract_strided_slice %56 {offsets = [0, 0, 8], sizes = [2, 8, 8], strides = [1, 1, 1]} : vector<2x8x64xbf16> to vector<2x8x8xbf16>
    %77 = vector.extract_strided_slice %56 {offsets = [0, 0, 40], sizes = [2, 8, 8], strides = [1, 1, 1]} : vector<2x8x64xbf16> to vector<2x8x8xbf16>
    %cst_35 = arith.constant dense<0.000000e+00> : vector<2x8x8xf32>
    %78 = tpu.matmul %75, %76, %cst_35 {dimension_numbers = #tpu.dot_dimension_numbers<[2], [2], [1], [1], [0, 0, 0, 1, 1, 1], [0], [0]>} : vector<2x8x8xbf16>, vector<2x8x8xbf16>, vector<2x8x8xf32> -> vector<2x8x8xf32>
    %79 = vector.broadcast %12 : vector<1x8x8xf32> to vector<2x8x8xf32>
    %80 = arith.addf %78, %79 : vector<2x8x8xf32>
    %cst_36 = arith.constant dense<0xFF800000> : vector<2x8xf32>
    %81 = vector.multi_reduction <maximumf>, %80, %cst_36 [2] : vector<2x8x8xf32> to vector<2x8xf32>
    %82 = vector.shape_cast %81 : vector<2x8xf32> to vector<2x8x1xf32>
    %83 = vector.broadcast %82 : vector<2x8x1xf32> to vector<2x8x8xf32>
    %84 = arith.subf %80, %83 : vector<2x8x8xf32>
    %85 = math.exp %84 : vector<2x8x8xf32>
    %cst_37 = arith.constant dense<0.000000e+00> : vector<2x8xf32>
    %86 = vector.multi_reduction <add>, %85, %cst_37 [2] : vector<2x8x8xf32> to vector<2x8xf32>
    %87 = vector.shape_cast %86 : vector<2x8xf32> to vector<2x8x1xf32>
    %88 = tpu.reciprocal %87 {approx = true} : vector<2x8x1xf32> -> vector<2x8x1xf32>
    %89 = vector.broadcast %88 : vector<2x8x1xf32> to vector<2x8x8xf32>
    %90 = arith.mulf %85, %89 : vector<2x8x8xf32>
    %91 = arith.truncf %90 : vector<2x8x8xf32> to vector<2x8x8xbf16>
    %cst_38 = arith.constant dense<0.000000e+00> : vector<2x8x8xf32>
    %92 = tpu.matmul %91, %77, %cst_38 {dimension_numbers = #tpu.dot_dimension_numbers<[2], [1], [1], [2], [0, 0, 0, 1, 1, 2], [0], [0]>} : vector<2x8x8xbf16>, vector<2x8x8xbf16>, vector<2x8x8xf32> -> vector<2x8x8xf32>
    %93 = vector.extract_strided_slice %54 {offsets = [0, 0, 16], sizes = [2, 8, 8], strides = [1, 1, 1]} : vector<2x8x32xbf16> to vector<2x8x8xbf16>
    %94 = vector.extract_strided_slice %56 {offsets = [0, 0, 16], sizes = [2, 8, 8], strides = [1, 1, 1]} : vector<2x8x64xbf16> to vector<2x8x8xbf16>
    %95 = vector.extract_strided_slice %56 {offsets = [0, 0, 48], sizes = [2, 8, 8], strides = [1, 1, 1]} : vector<2x8x64xbf16> to vector<2x8x8xbf16>
    %cst_39 = arith.constant dense<0.000000e+00> : vector<2x8x8xf32>
    %96 = tpu.matmul %93, %94, %cst_39 {dimension_numbers = #tpu.dot_dimension_numbers<[2], [2], [1], [1], [0, 0, 0, 1, 1, 1], [0], [0]>} : vector<2x8x8xbf16>, vector<2x8x8xbf16>, vector<2x8x8xf32> -> vector<2x8x8xf32>
    %97 = vector.broadcast %12 : vector<1x8x8xf32> to vector<2x8x8xf32>
    %98 = arith.addf %96, %97 : vector<2x8x8xf32>
    %cst_40 = arith.constant dense<0xFF800000> : vector<2x8xf32>
    %99 = vector.multi_reduction <maximumf>, %98, %cst_40 [2] : vector<2x8x8xf32> to vector<2x8xf32>
    %100 = vector.shape_cast %99 : vector<2x8xf32> to vector<2x8x1xf32>
    %101 = vector.broadcast %100 : vector<2x8x1xf32> to vector<2x8x8xf32>
    %102 = arith.subf %98, %101 : vector<2x8x8xf32>
    %103 = math.exp %102 : vector<2x8x8xf32>
    %cst_41 = arith.constant dense<0.000000e+00> : vector<2x8xf32>
    %104 = vector.multi_reduction <add>, %103, %cst_41 [2] : vector<2x8x8xf32> to vector<2x8xf32>
    %105 = vector.shape_cast %104 : vector<2x8xf32> to vector<2x8x1xf32>
    %106 = tpu.reciprocal %105 {approx = true} : vector<2x8x1xf32> -> vector<2x8x1xf32>
    %107 = vector.broadcast %106 : vector<2x8x1xf32> to vector<2x8x8xf32>
    %108 = arith.mulf %103, %107 : vector<2x8x8xf32>
    %109 = arith.truncf %108 : vector<2x8x8xf32> to vector<2x8x8xbf16>
    %cst_42 = arith.constant dense<0.000000e+00> : vector<2x8x8xf32>
    %110 = tpu.matmul %109, %95, %cst_42 {dimension_numbers = #tpu.dot_dimension_numbers<[2], [1], [1], [2], [0, 0, 0, 1, 1, 2], [0], [0]>} : vector<2x8x8xbf16>, vector<2x8x8xbf16>, vector<2x8x8xf32> -> vector<2x8x8xf32>
    %111 = vector.extract_strided_slice %54 {offsets = [0, 0, 24], sizes = [2, 8, 8], strides = [1, 1, 1]} : vector<2x8x32xbf16> to vector<2x8x8xbf16>
    %112 = vector.extract_strided_slice %56 {offsets = [0, 0, 24], sizes = [2, 8, 8], strides = [1, 1, 1]} : vector<2x8x64xbf16> to vector<2x8x8xbf16>
    %113 = vector.extract_strided_slice %56 {offsets = [0, 0, 56], sizes = [2, 8, 8], strides = [1, 1, 1]} : vector<2x8x64xbf16> to vector<2x8x8xbf16>
    %cst_43 = arith.constant dense<0.000000e+00> : vector<2x8x8xf32>
    %114 = tpu.matmul %111, %112, %cst_43 {dimension_numbers = #tpu.dot_dimension_numbers<[2], [2], [1], [1], [0, 0, 0, 1, 1, 1], [0], [0]>} : vector<2x8x8xbf16>, vector<2x8x8xbf16>, vector<2x8x8xf32> -> vector<2x8x8xf32>
    %115 = vector.broadcast %12 : vector<1x8x8xf32> to vector<2x8x8xf32>
    %116 = arith.addf %114, %115 : vector<2x8x8xf32>
    %cst_44 = arith.constant dense<0xFF800000> : vector<2x8xf32>
    %117 = vector.multi_reduction <maximumf>, %116, %cst_44 [2] : vector<2x8x8xf32> to vector<2x8xf32>
    %118 = vector.shape_cast %117 : vector<2x8xf32> to vector<2x8x1xf32>
    %119 = vector.broadcast %118 : vector<2x8x1xf32> to vector<2x8x8xf32>
    %120 = arith.subf %116, %119 : vector<2x8x8xf32>
    %121 = math.exp %120 : vector<2x8x8xf32>
    %cst_45 = arith.constant dense<0.000000e+00> : vector<2x8xf32>
    %122 = vector.multi_reduction <add>, %121, %cst_45 [2] : vector<2x8x8xf32> to vector<2x8xf32>
    %123 = vector.shape_cast %122 : vector<2x8xf32> to vector<2x8x1xf32>
    %124 = tpu.reciprocal %123 {approx = true} : vector<2x8x1xf32> -> vector<2x8x1xf32>
    %125 = vector.broadcast %124 : vector<2x8x1xf32> to vector<2x8x8xf32>
    %126 = arith.mulf %121, %125 : vector<2x8x8xf32>
    %127 = arith.truncf %126 : vector<2x8x8xf32> to vector<2x8x8xbf16>
    %cst_46 = arith.constant dense<0.000000e+00> : vector<2x8x8xf32>
    %128 = tpu.matmul %127, %113, %cst_46 {dimension_numbers = #tpu.dot_dimension_numbers<[2], [1], [1], [2], [0, 0, 0, 1, 1, 2], [0], [0]>} : vector<2x8x8xbf16>, vector<2x8x8xbf16>, vector<2x8x8xf32> -> vector<2x8x8xf32>
    %129 = tpu.concatenate %74, %92, %110, %128 in 2 : vector<2x8x8xf32>, vector<2x8x8xf32>, vector<2x8x8xf32>, vector<2x8x8xf32> -> vector<2x8x32xf32>
    %130 = vector.shape_cast %129 : vector<2x8x32xf32> to vector<16x32xf32>
    %131 = arith.truncf %130 : vector<16x32xf32> to vector<16x32xbf16>
    %c0_47 = arith.constant 0 : index
    %c0_48 = arith.constant 0 : index
    %c0_49 = arith.constant 0 : index
    %132 = vector.load %arg10[%c0_47, %c0_48, %c0_49] : memref<2x32x32xbf16, #tpu.memory_space<vmem>>, vector<1x32x32xbf16>
    %133 = vector.shape_cast %132 : vector<1x32x32xbf16> to vector<32x32xbf16>
    %cst_50 = arith.constant dense<0.000000e+00> : vector<16x32xf32>
    %134 = tpu.matmul %131, %133, %cst_50 {dimension_numbers = #tpu.dot_dimension_numbers<[1], [0], [0], [1], [0, 0, 1, 1], [], []>} : vector<16x32xbf16>, vector<32x32xbf16>, vector<16x32xf32> -> vector<16x32xf32>
    %c0_51 = arith.constant 0 : index
    %c0_52 = arith.constant 0 : index
    %c0_53 = arith.constant 0 : index
    %135 = vector.load %arg11[%c0_51, %c0_52, %c0_53] : memref<2x1x32xf32, #tpu.memory_space<vmem>>, vector<1x1x32xf32>
    %136 = vector.shape_cast %135 : vector<1x1x32xf32> to vector<1x32xf32>
    %137 = vector.broadcast %136 : vector<1x32xf32> to vector<16x32xf32>
    %138 = arith.addf %134, %137 : vector<16x32xf32>
    %139 = arith.addf %36, %138 : vector<16x32xf32>
    %c0_54 = arith.constant 0 : index
    %c0_55 = arith.constant 0 : index
    %c0_56 = arith.constant 0 : index
    %140 = vector.load %arg12[%c0_54, %c0_55, %c0_56] : memref<2x1x32xf32, #tpu.memory_space<vmem>>, vector<1x1x32xf32>
    %141 = vector.shape_cast %140 : vector<1x1x32xf32> to vector<1x32xf32>
    %c0_57 = arith.constant 0 : index
    %c0_58 = arith.constant 0 : index
    %c0_59 = arith.constant 0 : index
    %142 = vector.load %arg13[%c0_57, %c0_58, %c0_59] : memref<2x1x32xf32, #tpu.memory_space<vmem>>, vector<1x1x32xf32>
    %143 = vector.shape_cast %142 : vector<1x1x32xf32> to vector<1x32xf32>
    %cst_60 = arith.constant dense<0.000000e+00> : vector<16xf32>
    %144 = vector.multi_reduction <add>, %139, %cst_60 [1] : vector<16x32xf32> to vector<16xf32>
    %145 = vector.shape_cast %144 : vector<16xf32> to vector<16x1xf32>
    %cst_61 = arith.constant 3.200000e+01 : f32
    %146 = vector.broadcast %cst_61 : f32 to vector<16x1xf32>
    %147 = arith.divf %145, %146 : vector<16x1xf32>
    %148 = vector.broadcast %147 : vector<16x1xf32> to vector<16x32xf32>
    %149 = arith.subf %139, %148 : vector<16x32xf32>
    %150 = arith.mulf %149, %149 : vector<16x32xf32>
    %cst_62 = arith.constant dense<0.000000e+00> : vector<16xf32>
    %151 = vector.multi_reduction <add>, %150, %cst_62 [1] : vector<16x32xf32> to vector<16xf32>
    %152 = vector.shape_cast %151 : vector<16xf32> to vector<16x1xf32>
    %cst_63 = arith.constant 3.200000e+01 : f32
    %153 = vector.broadcast %cst_63 : f32 to vector<16x1xf32>
    %154 = arith.divf %152, %153 : vector<16x1xf32>
    %cst_64 = arith.constant 9.99999993E-9 : f32
    %155 = vector.broadcast %cst_64 : f32 to vector<16x1xf32>
    %156 = arith.addf %154, %155 : vector<16x1xf32>
    %157 = math.rsqrt %156 : vector<16x1xf32>
    %158 = vector.broadcast %157 : vector<16x1xf32> to vector<16x32xf32>
    %159 = arith.mulf %149, %158 : vector<16x32xf32>
    %160 = vector.broadcast %141 : vector<1x32xf32> to vector<16x32xf32>
    %161 = arith.mulf %159, %160 : vector<16x32xf32>
    %162 = vector.broadcast %143 : vector<1x32xf32> to vector<16x32xf32>
    %163 = arith.addf %161, %162 : vector<16x32xf32>
    %164 = arith.truncf %163 : vector<16x32xf32> to vector<16x32xbf16>
    %c0_65 = arith.constant 0 : index
    %c0_66 = arith.constant 0 : index
    %c0_67 = arith.constant 0 : index
    %165 = vector.load %arg14[%c0_65, %c0_66, %c0_67] : memref<2x32x32xbf16, #tpu.memory_space<vmem>>, vector<1x32x32xbf16>
    %166 = vector.shape_cast %165 : vector<1x32x32xbf16> to vector<32x32xbf16>
    %cst_68 = arith.constant dense<0.000000e+00> : vector<16x32xf32>
    %167 = tpu.matmul %164, %166, %cst_68 {dimension_numbers = #tpu.dot_dimension_numbers<[1], [0], [0], [1], [0, 0, 1, 1], [], []>} : vector<16x32xbf16>, vector<32x32xbf16>, vector<16x32xf32> -> vector<16x32xf32>
    %c0_69 = arith.constant 0 : index
    %c0_70 = arith.constant 0 : index
    %c0_71 = arith.constant 0 : index
    %168 = vector.load %arg15[%c0_69, %c0_70, %c0_71] : memref<2x1x32xf32, #tpu.memory_space<vmem>>, vector<1x1x32xf32>
    %169 = vector.shape_cast %168 : vector<1x1x32xf32> to vector<1x32xf32>
    %170 = vector.broadcast %169 : vector<1x32xf32> to vector<16x32xf32>
    %171 = arith.addf %167, %170 : vector<16x32xf32>
    %cst_72 = arith.constant 0.000000e+00 : f32
    %172 = vector.broadcast %cst_72 : f32 to vector<16x32xf32>
    %173 = arith.maximumf %171, %172 : vector<16x32xf32>
    %174 = arith.truncf %173 : vector<16x32xf32> to vector<16x32xbf16>
    %c0_73 = arith.constant 0 : index
    %c0_74 = arith.constant 0 : index
    %c0_75 = arith.constant 0 : index
    %175 = vector.load %arg16[%c0_73, %c0_74, %c0_75] : memref<2x32x32xbf16, #tpu.memory_space<vmem>>, vector<1x32x32xbf16>
    %176 = vector.shape_cast %175 : vector<1x32x32xbf16> to vector<32x32xbf16>
    %cst_76 = arith.constant dense<0.000000e+00> : vector<16x32xf32>
    %177 = tpu.matmul %174, %176, %cst_76 {dimension_numbers = #tpu.dot_dimension_numbers<[1], [0], [0], [1], [0, 0, 1, 1], [], []>} : vector<16x32xbf16>, vector<32x32xbf16>, vector<16x32xf32> -> vector<16x32xf32>
    %c0_77 = arith.constant 0 : index
    %c0_78 = arith.constant 0 : index
    %c0_79 = arith.constant 0 : index
    %178 = vector.load %arg17[%c0_77, %c0_78, %c0_79] : memref<2x1x32xf32, #tpu.memory_space<vmem>>, vector<1x1x32xf32>
    %179 = vector.shape_cast %178 : vector<1x1x32xf32> to vector<1x32xf32>
    %180 = vector.broadcast %179 : vector<1x32xf32> to vector<16x32xf32>
    %181 = arith.addf %177, %180 : vector<16x32xf32>
    %182 = arith.addf %163, %181 : vector<16x32xf32>
    %183 = vector.broadcast %1 : vector<16x1xf32> to vector<16x32xf32>
    %184 = arith.mulf %182, %183 : vector<16x32xf32>
    %c1 = arith.constant 1 : index
    %c0_80 = arith.constant 0 : index
    %c0_81 = arith.constant 0 : index
    %185 = vector.load %arg4[%c1, %c0_80, %c0_81] : memref<2x1x32xf32, #tpu.memory_space<vmem>>, vector<1x1x32xf32>
    %186 = vector.shape_cast %185 : vector<1x1x32xf32> to vector<1x32xf32>
    %c1_82 = arith.constant 1 : index
    %c0_83 = arith.constant 0 : index
    %c0_84 = arith.constant 0 : index
    %187 = vector.load %arg5[%c1_82, %c0_83, %c0_84] : memref<2x1x32xf32, #tpu.memory_space<vmem>>, vector<1x1x32xf32>
    %188 = vector.shape_cast %187 : vector<1x1x32xf32> to vector<1x32xf32>
    %cst_85 = arith.constant dense<0.000000e+00> : vector<16xf32>
    %189 = vector.multi_reduction <add>, %184, %cst_85 [1] : vector<16x32xf32> to vector<16xf32>
    %190 = vector.shape_cast %189 : vector<16xf32> to vector<16x1xf32>
    %cst_86 = arith.constant 3.200000e+01 : f32
    %191 = vector.broadcast %cst_86 : f32 to vector<16x1xf32>
    %192 = arith.divf %190, %191 : vector<16x1xf32>
    %193 = vector.broadcast %192 : vector<16x1xf32> to vector<16x32xf32>
    %194 = arith.subf %184, %193 : vector<16x32xf32>
    %195 = arith.mulf %194, %194 : vector<16x32xf32>
    %cst_87 = arith.constant dense<0.000000e+00> : vector<16xf32>
    %196 = vector.multi_reduction <add>, %195, %cst_87 [1] : vector<16x32xf32> to vector<16xf32>
    %197 = vector.shape_cast %196 : vector<16xf32> to vector<16x1xf32>
    %cst_88 = arith.constant 3.200000e+01 : f32
    %198 = vector.broadcast %cst_88 : f32 to vector<16x1xf32>
    %199 = arith.divf %197, %198 : vector<16x1xf32>
    %cst_89 = arith.constant 9.99999993E-9 : f32
    %200 = vector.broadcast %cst_89 : f32 to vector<16x1xf32>
    %201 = arith.addf %199, %200 : vector<16x1xf32>
    %202 = math.rsqrt %201 : vector<16x1xf32>
    %203 = vector.broadcast %202 : vector<16x1xf32> to vector<16x32xf32>
    %204 = arith.mulf %194, %203 : vector<16x32xf32>
    %205 = vector.broadcast %186 : vector<1x32xf32> to vector<16x32xf32>
    %206 = arith.mulf %204, %205 : vector<16x32xf32>
    %207 = vector.broadcast %188 : vector<1x32xf32> to vector<16x32xf32>
    %208 = arith.addf %206, %207 : vector<16x32xf32>
    %209 = arith.truncf %208 : vector<16x32xf32> to vector<16x32xbf16>
    %c1_90 = arith.constant 1 : index
    %c0_91 = arith.constant 0 : index
    %c0_92 = arith.constant 0 : index
    %210 = vector.load %arg6[%c1_90, %c0_91, %c0_92] : memref<2x32x32xbf16, #tpu.memory_space<vmem>>, vector<1x32x32xbf16>
    %211 = vector.shape_cast %210 : vector<1x32x32xbf16> to vector<32x32xbf16>
    %cst_93 = arith.constant dense<0.000000e+00> : vector<16x32xf32>
    %212 = tpu.matmul %209, %211, %cst_93 {dimension_numbers = #tpu.dot_dimension_numbers<[1], [0], [0], [1], [0, 0, 1, 1], [], []>} : vector<16x32xbf16>, vector<32x32xbf16>, vector<16x32xf32> -> vector<16x32xf32>
    %c1_94 = arith.constant 1 : index
    %c0_95 = arith.constant 0 : index
    %c0_96 = arith.constant 0 : index
    %213 = vector.load %arg7[%c1_94, %c0_95, %c0_96] : memref<2x1x32xf32, #tpu.memory_space<vmem>>, vector<1x1x32xf32>
    %214 = vector.shape_cast %213 : vector<1x1x32xf32> to vector<1x32xf32>
    %215 = vector.broadcast %214 : vector<1x32xf32> to vector<16x32xf32>
    %216 = arith.addf %212, %215 : vector<16x32xf32>
    %217 = arith.truncf %184 : vector<16x32xf32> to vector<16x32xbf16>
    %c1_97 = arith.constant 1 : index
    %c0_98 = arith.constant 0 : index
    %c0_99 = arith.constant 0 : index
    %218 = vector.load %arg8[%c1_97, %c0_98, %c0_99] : memref<2x32x64xbf16, #tpu.memory_space<vmem>>, vector<1x32x64xbf16>
    %219 = vector.shape_cast %218 : vector<1x32x64xbf16> to vector<32x64xbf16>
    %cst_100 = arith.constant dense<0.000000e+00> : vector<16x64xf32>
    %220 = tpu.matmul %217, %219, %cst_100 {dimension_numbers = #tpu.dot_dimension_numbers<[1], [0], [0], [1], [0, 0, 1, 1], [], []>} : vector<16x32xbf16>, vector<32x64xbf16>, vector<16x64xf32> -> vector<16x64xf32>
    %c1_101 = arith.constant 1 : index
    %c0_102 = arith.constant 0 : index
    %c0_103 = arith.constant 0 : index
    %221 = vector.load %arg9[%c1_101, %c0_102, %c0_103] : memref<2x1x64xf32, #tpu.memory_space<vmem>>, vector<1x1x64xf32>
    %222 = vector.shape_cast %221 : vector<1x1x64xf32> to vector<1x64xf32>
    %223 = vector.broadcast %222 : vector<1x64xf32> to vector<16x64xf32>
    %224 = arith.addf %220, %223 : vector<16x64xf32>
    %225 = vector.shape_cast %216 : vector<16x32xf32> to vector<2x8x32xf32>
    %226 = arith.truncf %225 : vector<2x8x32xf32> to vector<2x8x32xbf16>
    %227 = vector.shape_cast %224 : vector<16x64xf32> to vector<2x8x64xf32>
    %228 = arith.truncf %227 : vector<2x8x64xf32> to vector<2x8x64xbf16>
    %229 = vector.extract_strided_slice %226 {offsets = [0, 0, 0], sizes = [2, 8, 8], strides = [1, 1, 1]} : vector<2x8x32xbf16> to vector<2x8x8xbf16>
    %230 = vector.extract_strided_slice %228 {offsets = [0, 0, 0], sizes = [2, 8, 8], strides = [1, 1, 1]} : vector<2x8x64xbf16> to vector<2x8x8xbf16>
    %231 = vector.extract_strided_slice %228 {offsets = [0, 0, 32], sizes = [2, 8, 8], strides = [1, 1, 1]} : vector<2x8x64xbf16> to vector<2x8x8xbf16>
    %cst_104 = arith.constant dense<0.000000e+00> : vector<2x8x8xf32>
    %232 = tpu.matmul %229, %230, %cst_104 {dimension_numbers = #tpu.dot_dimension_numbers<[2], [2], [1], [1], [0, 0, 0, 1, 1, 1], [0], [0]>} : vector<2x8x8xbf16>, vector<2x8x8xbf16>, vector<2x8x8xf32> -> vector<2x8x8xf32>
    %233 = vector.broadcast %12 : vector<1x8x8xf32> to vector<2x8x8xf32>
    %234 = arith.addf %232, %233 : vector<2x8x8xf32>
    %cst_105 = arith.constant dense<0xFF800000> : vector<2x8xf32>
    %235 = vector.multi_reduction <maximumf>, %234, %cst_105 [2] : vector<2x8x8xf32> to vector<2x8xf32>
    %236 = vector.shape_cast %235 : vector<2x8xf32> to vector<2x8x1xf32>
    %237 = vector.broadcast %236 : vector<2x8x1xf32> to vector<2x8x8xf32>
    %238 = arith.subf %234, %237 : vector<2x8x8xf32>
    %239 = math.exp %238 : vector<2x8x8xf32>
    %cst_106 = arith.constant dense<0.000000e+00> : vector<2x8xf32>
    %240 = vector.multi_reduction <add>, %239, %cst_106 [2] : vector<2x8x8xf32> to vector<2x8xf32>
    %241 = vector.shape_cast %240 : vector<2x8xf32> to vector<2x8x1xf32>
    %242 = tpu.reciprocal %241 {approx = true} : vector<2x8x1xf32> -> vector<2x8x1xf32>
    %243 = vector.broadcast %242 : vector<2x8x1xf32> to vector<2x8x8xf32>
    %244 = arith.mulf %239, %243 : vector<2x8x8xf32>
    %245 = arith.truncf %244 : vector<2x8x8xf32> to vector<2x8x8xbf16>
    %cst_107 = arith.constant dense<0.000000e+00> : vector<2x8x8xf32>
    %246 = tpu.matmul %245, %231, %cst_107 {dimension_numbers = #tpu.dot_dimension_numbers<[2], [1], [1], [2], [0, 0, 0, 1, 1, 2], [0], [0]>} : vector<2x8x8xbf16>, vector<2x8x8xbf16>, vector<2x8x8xf32> -> vector<2x8x8xf32>
    %247 = vector.extract_strided_slice %226 {offsets = [0, 0, 8], sizes = [2, 8, 8], strides = [1, 1, 1]} : vector<2x8x32xbf16> to vector<2x8x8xbf16>
    %248 = vector.extract_strided_slice %228 {offsets = [0, 0, 8], sizes = [2, 8, 8], strides = [1, 1, 1]} : vector<2x8x64xbf16> to vector<2x8x8xbf16>
    %249 = vector.extract_strided_slice %228 {offsets = [0, 0, 40], sizes = [2, 8, 8], strides = [1, 1, 1]} : vector<2x8x64xbf16> to vector<2x8x8xbf16>
    %cst_108 = arith.constant dense<0.000000e+00> : vector<2x8x8xf32>
    %250 = tpu.matmul %247, %248, %cst_108 {dimension_numbers = #tpu.dot_dimension_numbers<[2], [2], [1], [1], [0, 0, 0, 1, 1, 1], [0], [0]>} : vector<2x8x8xbf16>, vector<2x8x8xbf16>, vector<2x8x8xf32> -> vector<2x8x8xf32>
    %251 = vector.broadcast %12 : vector<1x8x8xf32> to vector<2x8x8xf32>
    %252 = arith.addf %250, %251 : vector<2x8x8xf32>
    %cst_109 = arith.constant dense<0xFF800000> : vector<2x8xf32>
    %253 = vector.multi_reduction <maximumf>, %252, %cst_109 [2] : vector<2x8x8xf32> to vector<2x8xf32>
    %254 = vector.shape_cast %253 : vector<2x8xf32> to vector<2x8x1xf32>
    %255 = vector.broadcast %254 : vector<2x8x1xf32> to vector<2x8x8xf32>
    %256 = arith.subf %252, %255 : vector<2x8x8xf32>
    %257 = math.exp %256 : vector<2x8x8xf32>
    %cst_110 = arith.constant dense<0.000000e+00> : vector<2x8xf32>
    %258 = vector.multi_reduction <add>, %257, %cst_110 [2] : vector<2x8x8xf32> to vector<2x8xf32>
    %259 = vector.shape_cast %258 : vector<2x8xf32> to vector<2x8x1xf32>
    %260 = tpu.reciprocal %259 {approx = true} : vector<2x8x1xf32> -> vector<2x8x1xf32>
    %261 = vector.broadcast %260 : vector<2x8x1xf32> to vector<2x8x8xf32>
    %262 = arith.mulf %257, %261 : vector<2x8x8xf32>
    %263 = arith.truncf %262 : vector<2x8x8xf32> to vector<2x8x8xbf16>
    %cst_111 = arith.constant dense<0.000000e+00> : vector<2x8x8xf32>
    %264 = tpu.matmul %263, %249, %cst_111 {dimension_numbers = #tpu.dot_dimension_numbers<[2], [1], [1], [2], [0, 0, 0, 1, 1, 2], [0], [0]>} : vector<2x8x8xbf16>, vector<2x8x8xbf16>, vector<2x8x8xf32> -> vector<2x8x8xf32>
    %265 = vector.extract_strided_slice %226 {offsets = [0, 0, 16], sizes = [2, 8, 8], strides = [1, 1, 1]} : vector<2x8x32xbf16> to vector<2x8x8xbf16>
    %266 = vector.extract_strided_slice %228 {offsets = [0, 0, 16], sizes = [2, 8, 8], strides = [1, 1, 1]} : vector<2x8x64xbf16> to vector<2x8x8xbf16>
    %267 = vector.extract_strided_slice %228 {offsets = [0, 0, 48], sizes = [2, 8, 8], strides = [1, 1, 1]} : vector<2x8x64xbf16> to vector<2x8x8xbf16>
    %cst_112 = arith.constant dense<0.000000e+00> : vector<2x8x8xf32>
    %268 = tpu.matmul %265, %266, %cst_112 {dimension_numbers = #tpu.dot_dimension_numbers<[2], [2], [1], [1], [0, 0, 0, 1, 1, 1], [0], [0]>} : vector<2x8x8xbf16>, vector<2x8x8xbf16>, vector<2x8x8xf32> -> vector<2x8x8xf32>
    %269 = vector.broadcast %12 : vector<1x8x8xf32> to vector<2x8x8xf32>
    %270 = arith.addf %268, %269 : vector<2x8x8xf32>
    %cst_113 = arith.constant dense<0xFF800000> : vector<2x8xf32>
    %271 = vector.multi_reduction <maximumf>, %270, %cst_113 [2] : vector<2x8x8xf32> to vector<2x8xf32>
    %272 = vector.shape_cast %271 : vector<2x8xf32> to vector<2x8x1xf32>
    %273 = vector.broadcast %272 : vector<2x8x1xf32> to vector<2x8x8xf32>
    %274 = arith.subf %270, %273 : vector<2x8x8xf32>
    %275 = math.exp %274 : vector<2x8x8xf32>
    %cst_114 = arith.constant dense<0.000000e+00> : vector<2x8xf32>
    %276 = vector.multi_reduction <add>, %275, %cst_114 [2] : vector<2x8x8xf32> to vector<2x8xf32>
    %277 = vector.shape_cast %276 : vector<2x8xf32> to vector<2x8x1xf32>
    %278 = tpu.reciprocal %277 {approx = true} : vector<2x8x1xf32> -> vector<2x8x1xf32>
    %279 = vector.broadcast %278 : vector<2x8x1xf32> to vector<2x8x8xf32>
    %280 = arith.mulf %275, %279 : vector<2x8x8xf32>
    %281 = arith.truncf %280 : vector<2x8x8xf32> to vector<2x8x8xbf16>
    %cst_115 = arith.constant dense<0.000000e+00> : vector<2x8x8xf32>
    %282 = tpu.matmul %281, %267, %cst_115 {dimension_numbers = #tpu.dot_dimension_numbers<[2], [1], [1], [2], [0, 0, 0, 1, 1, 2], [0], [0]>} : vector<2x8x8xbf16>, vector<2x8x8xbf16>, vector<2x8x8xf32> -> vector<2x8x8xf32>
    %283 = vector.extract_strided_slice %226 {offsets = [0, 0, 24], sizes = [2, 8, 8], strides = [1, 1, 1]} : vector<2x8x32xbf16> to vector<2x8x8xbf16>
    %284 = vector.extract_strided_slice %228 {offsets = [0, 0, 24], sizes = [2, 8, 8], strides = [1, 1, 1]} : vector<2x8x64xbf16> to vector<2x8x8xbf16>
    %285 = vector.extract_strided_slice %228 {offsets = [0, 0, 56], sizes = [2, 8, 8], strides = [1, 1, 1]} : vector<2x8x64xbf16> to vector<2x8x8xbf16>
    %cst_116 = arith.constant dense<0.000000e+00> : vector<2x8x8xf32>
    %286 = tpu.matmul %283, %284, %cst_116 {dimension_numbers = #tpu.dot_dimension_numbers<[2], [2], [1], [1], [0, 0, 0, 1, 1, 1], [0], [0]>} : vector<2x8x8xbf16>, vector<2x8x8xbf16>, vector<2x8x8xf32> -> vector<2x8x8xf32>
    %287 = vector.broadcast %12 : vector<1x8x8xf32> to vector<2x8x8xf32>
    %288 = arith.addf %286, %287 : vector<2x8x8xf32>
    %cst_117 = arith.constant dense<0xFF800000> : vector<2x8xf32>
    %289 = vector.multi_reduction <maximumf>, %288, %cst_117 [2] : vector<2x8x8xf32> to vector<2x8xf32>
    %290 = vector.shape_cast %289 : vector<2x8xf32> to vector<2x8x1xf32>
    %291 = vector.broadcast %290 : vector<2x8x1xf32> to vector<2x8x8xf32>
    %292 = arith.subf %288, %291 : vector<2x8x8xf32>
    %293 = math.exp %292 : vector<2x8x8xf32>
    %cst_118 = arith.constant dense<0.000000e+00> : vector<2x8xf32>
    %294 = vector.multi_reduction <add>, %293, %cst_118 [2] : vector<2x8x8xf32> to vector<2x8xf32>
    %295 = vector.shape_cast %294 : vector<2x8xf32> to vector<2x8x1xf32>
    %296 = tpu.reciprocal %295 {approx = true} : vector<2x8x1xf32> -> vector<2x8x1xf32>
    %297 = vector.broadcast %296 : vector<2x8x1xf32> to vector<2x8x8xf32>
    %298 = arith.mulf %293, %297 : vector<2x8x8xf32>
    %299 = arith.truncf %298 : vector<2x8x8xf32> to vector<2x8x8xbf16>
    %cst_119 = arith.constant dense<0.000000e+00> : vector<2x8x8xf32>
    %300 = tpu.matmul %299, %285, %cst_119 {dimension_numbers = #tpu.dot_dimension_numbers<[2], [1], [1], [2], [0, 0, 0, 1, 1, 2], [0], [0]>} : vector<2x8x8xbf16>, vector<2x8x8xbf16>, vector<2x8x8xf32> -> vector<2x8x8xf32>
    %301 = tpu.concatenate %246, %264, %282, %300 in 2 : vector<2x8x8xf32>, vector<2x8x8xf32>, vector<2x8x8xf32>, vector<2x8x8xf32> -> vector<2x8x32xf32>
    %302 = vector.shape_cast %301 : vector<2x8x32xf32> to vector<16x32xf32>
    %303 = arith.truncf %302 : vector<16x32xf32> to vector<16x32xbf16>
    %c1_120 = arith.constant 1 : index
    %c0_121 = arith.constant 0 : index
    %c0_122 = arith.constant 0 : index
    %304 = vector.load %arg10[%c1_120, %c0_121, %c0_122] : memref<2x32x32xbf16, #tpu.memory_space<vmem>>, vector<1x32x32xbf16>
    %305 = vector.shape_cast %304 : vector<1x32x32xbf16> to vector<32x32xbf16>
    %cst_123 = arith.constant dense<0.000000e+00> : vector<16x32xf32>
    %306 = tpu.matmul %303, %305, %cst_123 {dimension_numbers = #tpu.dot_dimension_numbers<[1], [0], [0], [1], [0, 0, 1, 1], [], []>} : vector<16x32xbf16>, vector<32x32xbf16>, vector<16x32xf32> -> vector<16x32xf32>
    %c1_124 = arith.constant 1 : index
    %c0_125 = arith.constant 0 : index
    %c0_126 = arith.constant 0 : index
    %307 = vector.load %arg11[%c1_124, %c0_125, %c0_126] : memref<2x1x32xf32, #tpu.memory_space<vmem>>, vector<1x1x32xf32>
    %308 = vector.shape_cast %307 : vector<1x1x32xf32> to vector<1x32xf32>
    %309 = vector.broadcast %308 : vector<1x32xf32> to vector<16x32xf32>
    %310 = arith.addf %306, %309 : vector<16x32xf32>
    %311 = arith.addf %208, %310 : vector<16x32xf32>
    %c1_127 = arith.constant 1 : index
    %c0_128 = arith.constant 0 : index
    %c0_129 = arith.constant 0 : index
    %312 = vector.load %arg12[%c1_127, %c0_128, %c0_129] : memref<2x1x32xf32, #tpu.memory_space<vmem>>, vector<1x1x32xf32>
    %313 = vector.shape_cast %312 : vector<1x1x32xf32> to vector<1x32xf32>
    %c1_130 = arith.constant 1 : index
    %c0_131 = arith.constant 0 : index
    %c0_132 = arith.constant 0 : index
    %314 = vector.load %arg13[%c1_130, %c0_131, %c0_132] : memref<2x1x32xf32, #tpu.memory_space<vmem>>, vector<1x1x32xf32>
    %315 = vector.shape_cast %314 : vector<1x1x32xf32> to vector<1x32xf32>
    %cst_133 = arith.constant dense<0.000000e+00> : vector<16xf32>
    %316 = vector.multi_reduction <add>, %311, %cst_133 [1] : vector<16x32xf32> to vector<16xf32>
    %317 = vector.shape_cast %316 : vector<16xf32> to vector<16x1xf32>
    %cst_134 = arith.constant 3.200000e+01 : f32
    %318 = vector.broadcast %cst_134 : f32 to vector<16x1xf32>
    %319 = arith.divf %317, %318 : vector<16x1xf32>
    %320 = vector.broadcast %319 : vector<16x1xf32> to vector<16x32xf32>
    %321 = arith.subf %311, %320 : vector<16x32xf32>
    %322 = arith.mulf %321, %321 : vector<16x32xf32>
    %cst_135 = arith.constant dense<0.000000e+00> : vector<16xf32>
    %323 = vector.multi_reduction <add>, %322, %cst_135 [1] : vector<16x32xf32> to vector<16xf32>
    %324 = vector.shape_cast %323 : vector<16xf32> to vector<16x1xf32>
    %cst_136 = arith.constant 3.200000e+01 : f32
    %325 = vector.broadcast %cst_136 : f32 to vector<16x1xf32>
    %326 = arith.divf %324, %325 : vector<16x1xf32>
    %cst_137 = arith.constant 9.99999993E-9 : f32
    %327 = vector.broadcast %cst_137 : f32 to vector<16x1xf32>
    %328 = arith.addf %326, %327 : vector<16x1xf32>
    %329 = math.rsqrt %328 : vector<16x1xf32>
    %330 = vector.broadcast %329 : vector<16x1xf32> to vector<16x32xf32>
    %331 = arith.mulf %321, %330 : vector<16x32xf32>
    %332 = vector.broadcast %313 : vector<1x32xf32> to vector<16x32xf32>
    %333 = arith.mulf %331, %332 : vector<16x32xf32>
    %334 = vector.broadcast %315 : vector<1x32xf32> to vector<16x32xf32>
    %335 = arith.addf %333, %334 : vector<16x32xf32>
    %336 = arith.truncf %335 : vector<16x32xf32> to vector<16x32xbf16>
    %c1_138 = arith.constant 1 : index
    %c0_139 = arith.constant 0 : index
    %c0_140 = arith.constant 0 : index
    %337 = vector.load %arg14[%c1_138, %c0_139, %c0_140] : memref<2x32x32xbf16, #tpu.memory_space<vmem>>, vector<1x32x32xbf16>
    %338 = vector.shape_cast %337 : vector<1x32x32xbf16> to vector<32x32xbf16>
    %cst_141 = arith.constant dense<0.000000e+00> : vector<16x32xf32>
    %339 = tpu.matmul %336, %338, %cst_141 {dimension_numbers = #tpu.dot_dimension_numbers<[1], [0], [0], [1], [0, 0, 1, 1], [], []>} : vector<16x32xbf16>, vector<32x32xbf16>, vector<16x32xf32> -> vector<16x32xf32>
    %c1_142 = arith.constant 1 : index
    %c0_143 = arith.constant 0 : index
    %c0_144 = arith.constant 0 : index
    %340 = vector.load %arg15[%c1_142, %c0_143, %c0_144] : memref<2x1x32xf32, #tpu.memory_space<vmem>>, vector<1x1x32xf32>
    %341 = vector.shape_cast %340 : vector<1x1x32xf32> to vector<1x32xf32>
    %342 = vector.broadcast %341 : vector<1x32xf32> to vector<16x32xf32>
    %343 = arith.addf %339, %342 : vector<16x32xf32>
    %cst_145 = arith.constant 0.000000e+00 : f32
    %344 = vector.broadcast %cst_145 : f32 to vector<16x32xf32>
    %345 = arith.maximumf %343, %344 : vector<16x32xf32>
    %346 = arith.truncf %345 : vector<16x32xf32> to vector<16x32xbf16>
    %c1_146 = arith.constant 1 : index
    %c0_147 = arith.constant 0 : index
    %c0_148 = arith.constant 0 : index
    %347 = vector.load %arg16[%c1_146, %c0_147, %c0_148] : memref<2x32x32xbf16, #tpu.memory_space<vmem>>, vector<1x32x32xbf16>
    %348 = vector.shape_cast %347 : vector<1x32x32xbf16> to vector<32x32xbf16>
    %cst_149 = arith.constant dense<0.000000e+00> : vector<16x32xf32>
    %349 = tpu.matmul %346, %348, %cst_149 {dimension_numbers = #tpu.dot_dimension_numbers<[1], [0], [0], [1], [0, 0, 1, 1], [], []>} : vector<16x32xbf16>, vector<32x32xbf16>, vector<16x32xf32> -> vector<16x32xf32>
    %c1_150 = arith.constant 1 : index
    %c0_151 = arith.constant 0 : index
    %c0_152 = arith.constant 0 : index
    %350 = vector.load %arg17[%c1_150, %c0_151, %c0_152] : memref<2x1x32xf32, #tpu.memory_space<vmem>>, vector<1x1x32xf32>
    %351 = vector.shape_cast %350 : vector<1x1x32xf32> to vector<1x32xf32>
    %352 = vector.broadcast %351 : vector<1x32xf32> to vector<16x32xf32>
    %353 = arith.addf %349, %352 : vector<16x32xf32>
    %354 = arith.addf %335, %353 : vector<16x32xf32>
    %355 = vector.broadcast %1 : vector<16x1xf32> to vector<16x32xf32>
    %356 = arith.mulf %354, %355 : vector<16x32xf32>
    %c0_153 = arith.constant 0 : index
    %c0_154 = arith.constant 0 : index
    %357 = vector.load %arg18[%c0_153, %c0_154] : memref<1x32xf32, #tpu.memory_space<vmem>>, vector<1x32xf32>
    %c0_155 = arith.constant 0 : index
    %c0_156 = arith.constant 0 : index
    %358 = vector.load %arg19[%c0_155, %c0_156] : memref<1x32xf32, #tpu.memory_space<vmem>>, vector<1x32xf32>
    %cst_157 = arith.constant dense<0.000000e+00> : vector<16xf32>
    %359 = vector.multi_reduction <add>, %356, %cst_157 [1] : vector<16x32xf32> to vector<16xf32>
    %360 = vector.shape_cast %359 : vector<16xf32> to vector<16x1xf32>
    %cst_158 = arith.constant 3.200000e+01 : f32
    %361 = vector.broadcast %cst_158 : f32 to vector<16x1xf32>
    %362 = arith.divf %360, %361 : vector<16x1xf32>
    %363 = vector.broadcast %362 : vector<16x1xf32> to vector<16x32xf32>
    %364 = arith.subf %356, %363 : vector<16x32xf32>
    %365 = arith.mulf %364, %364 : vector<16x32xf32>
    %cst_159 = arith.constant dense<0.000000e+00> : vector<16xf32>
    %366 = vector.multi_reduction <add>, %365, %cst_159 [1] : vector<16x32xf32> to vector<16xf32>
    %367 = vector.shape_cast %366 : vector<16xf32> to vector<16x1xf32>
    %cst_160 = arith.constant 3.200000e+01 : f32
    %368 = vector.broadcast %cst_160 : f32 to vector<16x1xf32>
    %369 = arith.divf %367, %368 : vector<16x1xf32>
    %cst_161 = arith.constant 9.99999993E-9 : f32
    %370 = vector.broadcast %cst_161 : f32 to vector<16x1xf32>
    %371 = arith.addf %369, %370 : vector<16x1xf32>
    %372 = math.rsqrt %371 : vector<16x1xf32>
    %373 = vector.broadcast %372 : vector<16x1xf32> to vector<16x32xf32>
    %374 = arith.mulf %364, %373 : vector<16x32xf32>
    %375 = vector.broadcast %357 : vector<1x32xf32> to vector<16x32xf32>
    %376 = arith.mulf %374, %375 : vector<16x32xf32>
    %377 = vector.broadcast %358 : vector<1x32xf32> to vector<16x32xf32>
    %378 = arith.addf %376, %377 : vector<16x32xf32>
    %379 = vector.shape_cast %378 : vector<16x32xf32> to vector<2x8x32xf32>
    %380 = vector.broadcast %0 : vector<2x8x1xf32> to vector<2x8x32xf32>
    %381 = arith.mulf %379, %380 : vector<2x8x32xf32>
    %cst_162 = arith.constant dense<0.000000e+00> : vector<2x32xf32>
    %382 = vector.multi_reduction <add>, %381, %cst_162 [1] : vector<2x8x32xf32> to vector<2x32xf32>
    %cst_163 = arith.constant dense<0.000000e+00> : vector<2x1xf32>
    %383 = vector.multi_reduction <add>, %0, %cst_163 [1] : vector<2x8x1xf32> to vector<2x1xf32>
    %384 = vector.broadcast %383 : vector<2x1xf32> to vector<2x32xf32>
    %385 = arith.divf %382, %384 : vector<2x32xf32>
    %386 = arith.cmpf one, %385, %385 : vector<2x32xf32>
    %cst_164 = arith.constant 0.000000e+00 : f32
    %387 = vector.broadcast %cst_164 : f32 to vector<2x32xf32>
    %388 = arith.select %386, %387, %385 : vector<2x32xi1>, vector<2x32xf32>
    %c0_165 = arith.constant 0 : index
    %c0_166 = arith.constant 0 : index
    %389 = vector.load %arg3[%c0_165, %c0_166] : memref<2x32xf32, #tpu.memory_space<vmem>>, vector<2x32xf32>
    %390 = arith.mulf %388, %389 : vector<2x32xf32>
    %cst_167 = arith.constant dense<0.000000e+00> : vector<2xf32>
    %391 = vector.multi_reduction <add>, %390, %cst_167 [1] : vector<2x32xf32> to vector<2xf32>
    %392 = vector.shape_cast %391 : vector<2xf32> to vector<2x1xf32>
    %393 = vector.shape_cast %392 : vector<2x1xf32> to vector<2x1x1xf32>
    %c0_168 = arith.constant 0 : index
    %c0_169 = arith.constant 0 : index
    %c0_170 = arith.constant 0 : index
    %394 = vector.load %arg20[%c0_168, %c0_169, %c0_170] : memref<2x1x1xf32, #tpu.memory_space<vmem>>, vector<2x1x1xf32>
    tpu.vector_store %arg20[%c0_168, %c0_169, %c0_170], %393 {strides = array<i32>} : memref<2x1x1xf32, #tpu.memory_space<vmem>>, vector<2x1x1xf32>,
    return
  }
  func.func @transform_0(%arg0: i32) -> (i32, i32, i32) {
    %c0_i32 = arith.constant 0 : i32
    %c0_i32_0 = arith.constant 0 : i32
    %c0_i32_1 = arith.constant 0 : i32
    return %arg0, %c0_i32, %c0_i32_0 : i32, i32, i32
  }
  func.func @transform_1(%arg0: i32) -> (i32, i32, i32) {
    %c0_i32 = arith.constant 0 : i32
    %c0_i32_0 = arith.constant 0 : i32
    %c0_i32_1 = arith.constant 0 : i32
    return %arg0, %c0_i32, %c0_i32_0 : i32, i32, i32
  }
  func.func @transform_2(%arg0: i32) -> (i32, i32) {
    %c0_i32 = arith.constant 0 : i32
    %c0_i32_0 = arith.constant 0 : i32
    return %arg0, %c0_i32 : i32, i32
  }
  func.func @transform_3(%arg0: i32) -> (i32, i32, i32) {
    %c0_i32 = arith.constant 0 : i32
    %c0_i32_0 = arith.constant 0 : i32
    %c0_i32_1 = arith.constant 0 : i32
    %c0_i32_2 = arith.constant 0 : i32
    return %c0_i32, %c0_i32_0, %c0_i32_1 : i32, i32, i32
  }
  func.func @transform_4(%arg0: i32) -> (i32, i32, i32) {
    %c0_i32 = arith.constant 0 : i32
    %c0_i32_0 = arith.constant 0 : i32
    %c0_i32_1 = arith.constant 0 : i32
    %c0_i32_2 = arith.constant 0 : i32
    return %c0_i32, %c0_i32_0, %c0_i32_1 : i32, i32, i32
  }
  func.func @transform_5(%arg0: i32) -> (i32, i32, i32) {
    %c0_i32 = arith.constant 0 : i32
    %c0_i32_0 = arith.constant 0 : i32
    %c0_i32_1 = arith.constant 0 : i32
    %c0_i32_2 = arith.constant 0 : i32
    return %c0_i32, %c0_i32_0, %c0_i32_1 : i32, i32, i32
  }
  func.func @transform_6(%arg0: i32) -> (i32, i32, i32) {
    %c0_i32 = arith.constant 0 : i32
    %c0_i32_0 = arith.constant 0 : i32
    %c0_i32_1 = arith.constant 0 : i32
    %c0_i32_2 = arith.constant 0 : i32
    return %c0_i32, %c0_i32_0, %c0_i32_1 : i32, i32, i32
  }
  func.func @transform_7(%arg0: i32) -> (i32, i32, i32) {
    %c0_i32 = arith.constant 0 : i32
    %c0_i32_0 = arith.constant 0 : i32
    %c0_i32_1 = arith.constant 0 : i32
    %c0_i32_2 = arith.constant 0 : i32
    return %c0_i32, %c0_i32_0, %c0_i32_1 : i32, i32, i32
  }
  func.func @transform_8(%arg0: i32) -> (i32, i32, i32) {
    %c0_i32 = arith.constant 0 : i32
    %c0_i32_0 = arith.constant 0 : i32
    %c0_i32_1 = arith.constant 0 : i32
    %c0_i32_2 = arith.constant 0 : i32
    return %c0_i32, %c0_i32_0, %c0_i32_1 : i32, i32, i32
  }
  func.func @transform_9(%arg0: i32) -> (i32, i32, i32) {
    %c0_i32 = arith.constant 0 : i32
    %c0_i32_0 = arith.constant 0 : i32
    %c0_i32_1 = arith.constant 0 : i32
    %c0_i32_2 = arith.constant 0 : i32
    return %c0_i32, %c0_i32_0, %c0_i32_1 : i32, i32, i32
  }
  func.func @transform_10(%arg0: i32) -> (i32, i32, i32) {
    %c0_i32 = arith.constant 0 : i32
    %c0_i32_0 = arith.constant 0 : i32
    %c0_i32_1 = arith.constant 0 : i32
    %c0_i32_2 = arith.constant 0 : i32
    return %c0_i32, %c0_i32_0, %c0_i32_1 : i32, i32, i32
  }
  func.func @transform_11(%arg0: i32) -> (i32, i32, i32) {
    %c0_i32 = arith.constant 0 : i32
    %c0_i32_0 = arith.constant 0 : i32
    %c0_i32_1 = arith.constant 0 : i32
    %c0_i32_2 = arith.constant 0 : i32
    return %c0_i32, %c0_i32_0, %c0_i32_1 : i32, i32, i32
  }
  func.func @transform_12(%arg0: i32) -> (i32, i32, i32) {
    %c0_i32 = arith.constant 0 : i32
    %c0_i32_0 = arith.constant 0 : i32
    %c0_i32_1 = arith.constant 0 : i32
    %c0_i32_2 = arith.constant 0 : i32
    return %c0_i32, %c0_i32_0, %c0_i32_1 : i32, i32, i32
  }
  func.func @transform_13(%arg0: i32) -> (i32, i32, i32) {
    %c0_i32 = arith.constant 0 : i32
    %c0_i32_0 = arith.constant 0 : i32
    %c0_i32_1 = arith.constant 0 : i32
    %c0_i32_2 = arith.constant 0 : i32
    return %c0_i32, %c0_i32_0, %c0_i32_1 : i32, i32, i32
  }
  func.func @transform_14(%arg0: i32) -> (i32, i32, i32) {
    %c0_i32 = arith.constant 0 : i32
    %c0_i32_0 = arith.constant 0 : i32
    %c0_i32_1 = arith.constant 0 : i32
    %c0_i32_2 = arith.constant 0 : i32
    return %c0_i32, %c0_i32_0, %c0_i32_1 : i32, i32, i32
  }
  func.func @transform_15(%arg0: i32) -> (i32, i32, i32) {
    %c0_i32 = arith.constant 0 : i32
    %c0_i32_0 = arith.constant 0 : i32
    %c0_i32_1 = arith.constant 0 : i32
    %c0_i32_2 = arith.constant 0 : i32
    return %c0_i32, %c0_i32_0, %c0_i32_1 : i32, i32, i32
  }
  func.func @transform_16(%arg0: i32) -> (i32, i32, i32) {
    %c0_i32 = arith.constant 0 : i32
    %c0_i32_0 = arith.constant 0 : i32
    %c0_i32_1 = arith.constant 0 : i32
    %c0_i32_2 = arith.constant 0 : i32
    return %c0_i32, %c0_i32_0, %c0_i32_1 : i32, i32, i32
  }
  func.func @transform_17(%arg0: i32) -> (i32, i32) {
    %c0_i32 = arith.constant 0 : i32
    %c0_i32_0 = arith.constant 0 : i32
    %c0_i32_1 = arith.constant 0 : i32
    return %c0_i32, %c0_i32_0 : i32, i32
  }
  func.func @transform_18(%arg0: i32) -> (i32, i32) {
    %c0_i32 = arith.constant 0 : i32
    %c0_i32_0 = arith.constant 0 : i32
    %c0_i32_1 = arith.constant 0 : i32
    return %c0_i32, %c0_i32_0 : i32, i32
  }
  func.func @transform_19(%arg0: i32) -> (i32, i32, i32) {
    %c0_i32 = arith.constant 0 : i32
    %c0_i32_0 = arith.constant 0 : i32
    %c0_i32_1 = arith.constant 0 : i32
    return %arg0, %c0_i32, %c0_i32_0 : i32, i32, i32
  }
}

</mosaic_0001>

<llo_original>
// kernel: tpu_custom_call.1
$region0: #{tpu_custom_call.1}
  #allocation0 [shape = 'u32[]', space=smem, size = 0x4, offset = 0x4, fixed_abs, tag = 'smem constant byte address 0x4 - core index']
  #allocation1 [shape = 'u32[72,128]{1,0:T(1,128)}', space=vmem, size = 0x9000, scoped, tag = 'internal scratch']
  %s0 = inlined_call_operand.hbm [shape: f32[2,8,32], index: 0, kind: input, shape index: {}]
  %s1 = inlined_call_operand.vmem [shape: f32[2,8,1], index: 1, kind: input, shape index: {}]
  %s2 = inlined_call_operand.hbm [shape: f32[2,32], index: 2, kind: input, shape index: {}]
  %s3 = inlined_call_operand.hbm [shape: f32[2,1,32], index: 3, kind: input, shape index: {}]
  %s4 = inlined_call_operand.hbm [shape: f32[2,1,32], index: 4, kind: input, shape index: {}]
  %s5 = inlined_call_operand.hbm [shape: bf16[2,32,32], index: 5, kind: input, shape index: {}]
  %s6 = inlined_call_operand.hbm [shape: f32[2,1,32], index: 6, kind: input, shape index: {}]
  %s7 = inlined_call_operand.hbm [shape: bf16[2,32,64], index: 7, kind: input, shape index: {}]
  %s8 = inlined_call_operand.hbm [shape: f32[2,1,64], index: 8, kind: input, shape index: {}]
  %s9 = inlined_call_operand.hbm [shape: bf16[2,32,32], index: 9, kind: input, shape index: {}]
  %s10 = inlined_call_operand.hbm [shape: f32[2,1,32], index: 10, kind: input, shape index: {}]
  %s11 = inlined_call_operand.hbm [shape: f32[2,1,32], index: 11, kind: input, shape index: {}]
  %s12 = inlined_call_operand.hbm [shape: f32[2,1,32], index: 12, kind: input, shape index: {}]
  %s13 = inlined_call_operand.hbm [shape: bf16[2,32,32], index: 13, kind: input, shape index: {}]
  %s14 = inlined_call_operand.hbm [shape: f32[2,1,32], index: 14, kind: input, shape index: {}]
  %s15 = inlined_call_operand.vmem [shape: bf16[2,32,32], index: 15, kind: input, shape index: {}]
  %s16 = inlined_call_operand.hbm [shape: f32[2,1,32], index: 16, kind: input, shape index: {}]
  %s17 = inlined_call_operand.vmem [shape: f32[1,32], index: 17, kind: input, shape index: {}]
  %s18 = inlined_call_operand.vmem [shape: f32[1,32], index: 18, kind: input, shape index: {}]
  %s19 = inlined_call_operand.vmem [shape: f32[2,1,1], index: 19, kind: output, shape index: {}]
  %s20 = sld [smem:[#allocation0]]
  $region146: #{tpu_custom_call.1} parent=0
    _
  %s22 = ssub.s32 1, %s20
  %s23 = scalar_select 0, %s22, %s20
  $region1: #{tpu_custom_call.1} parent=0
    #allocation2 [shape = 'u8[8192]{0}', space=vmem, size = 0x2000, scoped, tag = 'input window, operand 0, single buffered']
    #allocation3 [shape = 's32[1]{0}', space=sflag, size = 0x4, scoped, tag = 'scoped memory for tpu_custom_call.1']
    #allocation4 [shape = 'u8[1024]{0}', space=vmem, size = 0x400, scoped, tag = 'input window, operand 2, single buffered']
    #allocation5 [shape = 's32[1]{0}', space=sflag, size = 0x4, scoped, tag = 'scoped memory for tpu_custom_call.1']
    #allocation6 [shape = 'u8[1024]{0}', space=vmem, size = 0x400, scoped, tag = 'input window, operand 3, single buffered']
    #allocation7 [shape = 'u8[1024]{0}', space=vmem, size = 0x400, scoped, tag = 'input window, operand 4, single buffered']
    #allocation8 [shape = 's32[1]{0}', space=sflag, size = 0x4, scoped, tag = 'scoped memory for tpu_custom_call.1']
    #allocation9 [shape = 'u8[16384]{0}', space=vmem, size = 0x4000, scoped, tag = 'input window, operand 5, single buffered']
    #allocation10 [shape = 'u8[1024]{0}', space=vmem, size = 0x400, scoped, tag = 'input window, operand 6, single buffered']
    #allocation11 [shape = 's32[1]{0}', space=sflag, size = 0x4, scoped, tag = 'scoped memory for tpu_custom_call.1']
    #allocation12 [shape = 'u8[16384]{0}', space=vmem, size = 0x4000, scoped, tag = 'input window, operand 7, single buffered']
    #allocation13 [shape = 'u8[1024]{0}', space=vmem, size = 0x400, scoped, tag = 'input window, operand 8, single buffered']
    #allocation14 [shape = 's32[1]{0}', space=sflag, size = 0x4, scoped, tag = 'scoped memory for tpu_custom_call.1']
    #allocation15 [shape = 'u8[16384]{0}', space=vmem, size = 0x4000, scoped, tag = 'input window, operand 9, single buffered']
    #allocation16 [shape = 'u8[1024]{0}', space=vmem, size = 0x400, scoped, tag = 'input window, operand 10, single buffered']
    #allocation17 [shape = 's32[1]{0}', space=sflag, size = 0x4, scoped, tag = 'scoped memory for tpu_custom_call.1']
    #allocation18 [shape = 'u8[1024]{0}', space=vmem, size = 0x400, scoped, tag = 'input window, operand 11, single buffered']
    #allocation19 [shape = 'u8[1024]{0}', space=vmem, size = 0x400, scoped, tag = 'input window, operand 12, single buffered']
    #allocation20 [shape = 's32[1]{0}', space=sflag, size = 0x4, scoped, tag = 'scoped memory for tpu_custom_call.1']
    #allocation21 [shape = 'u8[16384]{0}', space=vmem, size = 0x4000, scoped, tag = 'input window, operand 13, single buffered']
    #allocation22 [shape = 'u8[1024]{0}', space=vmem, size = 0x400, scoped, tag = 'input window, operand 14, single buffered']
    #allocation23 [shape = 's32[1]{0}', space=sflag, size = 0x4, scoped, tag = 'scoped memory for tpu_custom_call.1']
    #allocation24 [shape = 'u8[1024]{0}', space=vmem, size = 0x400, scoped, tag = 'input window, operand 16, single buffered']
    %24 = vsyncpa [#allocation3], 0
    %25 = vsyncpa [#allocation5], 0
    %26 = vsyncpa [#allocation8], 0
    %27 = vsyncpa [#allocation11], 0
    %28 = vsyncpa [#allocation14], 0
    %29 = vsyncpa [#allocation17], 0
    %30 = vsyncpa [#allocation20], 0
    %31 = vsyncpa [#allocation23], 0
    // Predicated region
    $region2: #{tpu_custom_call.1} parent=1 // pred_check
      _
    $region3: #{tpu_custom_call.1} parent=1 // pred_check_branch
      %33 = sbr.rel (0) target = $region5
    $region4: #{tpu_custom_call.1} parent=1 // pred_region
      %35 = vsyncadd [#allocation3], 0
      %s36 = sshll.u32 %s0, 4
      %s37 = int_to_ptr.hbm [resolvable:$true] %s36
      %s38 = sshll.u32 [#allocation2], 4
      %s39 = int_to_ptr.vmem [resolvable:$true] %s38
      %44 = dma.hbm_to_vmem [thread:$0]  %s37, 256, %s39, [#allocation3], 128, 128, 8
    $region5: #{tpu_custom_call.1} parent=1 // pred_fallthru
      _
    // Predicated region
    $region6: #{tpu_custom_call.1} parent=1 // pred_check
      _
    $region7: #{tpu_custom_call.1} parent=1 // pred_check_branch
      %46 = sbr.rel (0) target = $region9
    $region8: #{tpu_custom_call.1} parent=1 // pred_region
      _
    $region9: #{tpu_custom_call.1} parent=1 // pred_fallthru
      _
    // Predicated region
    $region10: #{tpu_custom_call.1} parent=1 // pred_check
      _
    $region11: #{tpu_custom_call.1} parent=1 // pred_check_branch
      %48 = sbr.rel (0) target = $region13
    $region12: #{tpu_custom_call.1} parent=1 // pred_region
      %50 = vsyncadd [#allocation5], 0
      %s52 = sshll.u32 %s2, 4
      %s53 = int_to_ptr.hbm [resolvable:$true] %s52
      %s54 = sshll.u32 [#allocation4], 4
      %s55 = int_to_ptr.vmem [resolvable:$true] %s54
      %57 = dma.hbm_to_vmem [thread:$0]  %s53, 32, %s55, [#allocation5]
    $region13: #{tpu_custom_call.1} parent=1 // pred_fallthru
      _
    // Predicated region
    $region14: #{tpu_custom_call.1} parent=1 // pred_check
      _
    $region15: #{tpu_custom_call.1} parent=1 // pred_check_branch
      %59 = sbr.rel (0) target = $region17
    $region16: #{tpu_custom_call.1} parent=1 // pred_region
      %61 = vsyncadd [#allocation5], 0
      %s62 = sshll.u32 %s3, 4
      %s63 = int_to_ptr.hbm [resolvable:$true] %s62
      %s64 = sshll.u32 [#allocation6], 4
      %s65 = int_to_ptr.vmem [resolvable:$true] %s64
      %70 = dma.hbm_to_vmem [thread:$0]  %s63, 32, %s65, [#allocation5], 16, 16, 1
    $region17: #{tpu_custom_call.1} parent=1 // pred_fallthru
      _
    // Predicated region
    $region18: #{tpu_custom_call.1} parent=1 // pred_check
      _
    $region19: #{tpu_custom_call.1} parent=1 // pred_check_branch
      %72 = sbr.rel (0) target = $region21
    $region20: #{tpu_custom_call.1} parent=1 // pred_region
      %74 = vsyncadd [#allocation8], 0
      %s75 = sshll.u32 %s4, 4
      %s76 = int_to_ptr.hbm [resolvable:$true] %s75
      %s77 = sshll.u32 [#allocation7], 4
      %s78 = int_to_ptr.vmem [resolvable:$true] %s77
      %83 = dma.hbm_to_vmem [thread:$0]  %s76, 32, %s78, [#allocation8], 16, 16, 1
    $region21: #{tpu_custom_call.1} parent=1 // pred_fallthru
      _
    // Predicated region
    $region22: #{tpu_custom_call.1} parent=1 // pred_check
      _
    $region23: #{tpu_custom_call.1} parent=1 // pred_check_branch
      %85 = sbr.rel (0) target = $region25
    $region24: #{tpu_custom_call.1} parent=1 // pred_region
      %87 = vsyncadd [#allocation8], 0
      %s88 = sshll.u32 %s5, 4
      %s89 = int_to_ptr.hbm [resolvable:$true] %s88
      %s90 = sshll.u32 [#allocation9], 4
      %s91 = int_to_ptr.vmem [resolvable:$true] %s90
      %96 = dma.hbm_to_vmem [thread:$0]  %s89, 512, %s91, [#allocation8], 64, 64, 4
    $region25: #{tpu_custom_call.1} parent=1 // pred_fallthru
      _
    // Predicated region
    $region26: #{tpu_custom_call.1} parent=1 // pred_check
      _
    $region27: #{tpu_custom_call.1} parent=1 // pred_check_branch
      %98 = sbr.rel (0) target = $region29
    $region28: #{tpu_custom_call.1} parent=1 // pred_region
      %100 = vsyncadd [#allocation11], 0
      %s101 = sshll.u32 %s6, 4
      %s102 = int_to_ptr.hbm [resolvable:$true] %s101
      %s103 = sshll.u32 [#allocation10], 4
      %s104 = int_to_ptr.vmem [resolvable:$true] %s103
      %109 = dma.hbm_to_vmem [thread:$0]  %s102, 32, %s104, [#allocation11], 16, 16, 1
    $region29: #{tpu_custom_call.1} parent=1 // pred_fallthru
      _
    // Predicated region
    $region30: #{tpu_custom_call.1} parent=1 // pred_check
      _
    $region31: #{tpu_custom_call.1} parent=1 // pred_check_branch
      %111 = sbr.rel (0) target = $region33
    $region32: #{tpu_custom_call.1} parent=1 // pred_region
      %113 = vsyncadd [#allocation11], 0
      %s114 = sshll.u32 %s7, 4
      %s115 = int_to_ptr.hbm [resolvable:$true] %s114
      %s116 = sshll.u32 [#allocation12], 4
      %s117 = int_to_ptr.vmem [resolvable:$true] %s116
      %122 = dma.hbm_to_vmem [thread:$0]  %s115, 512, %s117, [#allocation11], 64, 64, 4
    $region33: #{tpu_custom_call.1} parent=1 // pred_fallthru
      _
    // Predicated region
    $region34: #{tpu_custom_call.1} parent=1 // pred_check
      _
    $region35: #{tpu_custom_call.1} parent=1 // pred_check_branch
      %124 = sbr.rel (0) target = $region37
    $region36: #{tpu_custom_call.1} parent=1 // pred_region
      %126 = vsyncadd [#allocation14], 0
      %s127 = sshll.u32 %s8, 4
      %s128 = int_to_ptr.hbm [resolvable:$true] %s127
      %s129 = sshll.u32 [#allocation13], 4
      %s130 = int_to_ptr.vmem [resolvable:$true] %s129
      %135 = dma.hbm_to_vmem [thread:$0]  %s128, 32, %s130, [#allocation14], 16, 16, 1
    $region37: #{tpu_custom_call.1} parent=1 // pred_fallthru
      _
    // Predicated region
    $region38: #{tpu_custom_call.1} parent=1 // pred_check
      _
    $region39: #{tpu_custom_call.1} parent=1 // pred_check_branch
      %137 = sbr.rel (0) target = $region41
    $region40: #{tpu_custom_call.1} parent=1 // pred_region
      %139 = vsyncadd [#allocation14], 0
      %s140 = sshll.u32 %s9, 4
      %s141 = int_to_ptr.hbm [resolvable:$true] %s140
      %s142 = sshll.u32 [#allocation15], 4
      %s143 = int_to_ptr.vmem [resolvable:$true] %s142
      %148 = dma.hbm_to_vmem [thread:$0]  %s141, 512, %s143, [#allocation14], 64, 64, 4
    $region41: #{tpu_custom_call.1} parent=1 // pred_fallthru
      _
    // Predicated region
    $region42: #{tpu_custom_call.1} parent=1 // pred_check
      _
    $region43: #{tpu_custom_call.1} parent=1 // pred_check_branch
      %150 = sbr.rel (0) target = $region45
    $region44: #{tpu_custom_call.1} parent=1 // pred_region
      %152 = vsyncadd [#allocation17], 0
      %s153 = sshll.u32 %s10, 4
      %s154 = int_to_ptr.hbm [resolvable:$true] %s153
      %s155 = sshll.u32 [#allocation16], 4
      %s156 = int_to_ptr.vmem [resolvable:$true] %s155
      %161 = dma.hbm_to_vmem [thread:$0]  %s154, 32, %s156, [#allocation17], 16, 16, 1
    $region45: #{tpu_custom_call.1} parent=1 // pred_fallthru
      _
    // Predicated region
    $region46: #{tpu_custom_call.1} parent=1 // pred_check
      _
    $region47: #{tpu_custom_call.1} parent=1 // pred_check_branch
      %163 = sbr.rel (0) target = $region49
    $region48: #{tpu_custom_call.1} parent=1 // pred_region
      %165 = vsyncadd [#allocation17], 0
      %s166 = sshll.u32 %s11, 4
      %s167 = int_to_ptr.hbm [resolvable:$true] %s166
      %s168 = sshll.u32 [#allocation18], 4
      %s169 = int_to_ptr.vmem [resolvable:$true] %s168
      %174 = dma.hbm_to_vmem [thread:$0]  %s167, 32, %s169, [#allocation17], 16, 16, 1
    $region49: #{tpu_custom_call.1} parent=1 // pred_fallthru
      _
    // Predicated region
    $region50: #{tpu_custom_call.1} parent=1 // pred_check
      _
    $region51: #{tpu_custom_call.1} parent=1 // pred_check_branch
      %176 = sbr.rel (0) target = $region53
    $region52: #{tpu_custom_call.1} parent=1 // pred_region
      %178 = vsyncadd [#allocation20], 0
      %s179 = sshll.u32 %s12, 4
      %s180 = int_to_ptr.hbm [resolvable:$true] %s179
      %s181 = sshll.u32 [#allocation19], 4
      %s182 = int_to_ptr.vmem [resolvable:$true] %s181
      %187 = dma.hbm_to_vmem [thread:$0]  %s180, 32, %s182, [#allocation20], 16, 16, 1
    $region53: #{tpu_custom_call.1} parent=1 // pred_fallthru
      _
    // Predicated region
    $region54: #{tpu_custom_call.1} parent=1 // pred_check
      _
    $region55: #{tpu_custom_call.1} parent=1 // pred_check_branch
      %189 = sbr.rel (0) target = $region57
    $region56: #{tpu_custom_call.1} parent=1 // pred_region
      %191 = vsyncadd [#allocation20], 0
      %s192 = sshll.u32 %s13, 4
      %s193 = int_to_ptr.hbm [resolvable:$true] %s192
      %s194 = sshll.u32 [#allocation21], 4
      %s195 = int_to_ptr.vmem [resolvable:$true] %s194
      %200 = dma.hbm_to_vmem [thread:$0]  %s193, 512, %s195, [#allocation20], 64, 64, 4
    $region57: #{tpu_custom_call.1} parent=1 // pred_fallthru
      _
    // Predicated region
    $region58: #{tpu_custom_call.1} parent=1 // pred_check
      _
    $region59: #{tpu_custom_call.1} parent=1 // pred_check_branch
      %202 = sbr.rel (0) target = $region61
    $region60: #{tpu_custom_call.1} parent=1 // pred_region
      %204 = vsyncadd [#allocation23], 0
      %s205 = sshll.u32 %s14, 4
      %s206 = int_to_ptr.hbm [resolvable:$true] %s205
      %s207 = sshll.u32 [#allocation22], 4
      %s208 = int_to_ptr.vmem [resolvable:$true] %s207
      %213 = dma.hbm_to_vmem [thread:$0]  %s206, 32, %s208, [#allocation23], 16, 16, 1
    $region61: #{tpu_custom_call.1} parent=1 // pred_fallthru
      _
    // Predicated region
    $region62: #{tpu_custom_call.1} parent=1 // pred_check
      _
    $region63: #{tpu_custom_call.1} parent=1 // pred_check_branch
      %215 = sbr.rel (0) target = $region65
    $region64: #{tpu_custom_call.1} parent=1 // pred_region
      _
    $region65: #{tpu_custom_call.1} parent=1 // pred_fallthru
      _
    // Predicated region
    $region66: #{tpu_custom_call.1} parent=1 // pred_check
      _
    $region67: #{tpu_custom_call.1} parent=1 // pred_check_branch
      %217 = sbr.rel (0) target = $region69
    $region68: #{tpu_custom_call.1} parent=1 // pred_region
      %219 = vsyncadd [#allocation23], 0
      %s220 = sshll.u32 %s16, 4
      %s221 = int_to_ptr.hbm [resolvable:$true] %s220
      %s222 = sshll.u32 [#allocation24], 4
      %s223 = int_to_ptr.vmem [resolvable:$true] %s222
      %228 = dma.hbm_to_vmem [thread:$0]  %s221, 32, %s223, [#allocation23], 16, 16, 1
    $region69: #{tpu_custom_call.1} parent=1 // pred_fallthru
      _
    // Predicated region
    $region70: #{tpu_custom_call.1} parent=1 // pred_check
      _
    $region71: #{tpu_custom_call.1} parent=1 // pred_check_branch
      %230 = sbr.rel (0) target = $region73
    $region72: #{tpu_custom_call.1} parent=1 // pred_region
      _
    $region73: #{tpu_custom_call.1} parent=1 // pred_fallthru
      _
    // Predicated region
    $region74: #{tpu_custom_call.1} parent=1 // pred_check
      _
    $region75: #{tpu_custom_call.1} parent=1 // pred_check_branch
      %232 = sbr.rel (0) target = $region77
    $region76: #{tpu_custom_call.1} parent=1 // pred_region
      _
    $region77: #{tpu_custom_call.1} parent=1 // pred_fallthru
      _
    // Predicated region
    $region78: #{tpu_custom_call.1} parent=1 // pred_check
      _
    $region79: #{tpu_custom_call.1} parent=1 // pred_check_branch
      %234 = sbr.rel (0) target = $region81
    $region80: #{tpu_custom_call.1} parent=1 // pred_region
      %236 = dma.done [#allocation3], 256
    $region81: #{tpu_custom_call.1} parent=1 // pred_fallthru
      _
    // Predicated region
    $region82: #{tpu_custom_call.1} parent=1 // pred_check
      _
    $region83: #{tpu_custom_call.1} parent=1 // pred_check_branch
      %238 = sbr.rel (0) target = $region85
    $region84: #{tpu_custom_call.1} parent=1 // pred_region
      %240 = dma.done [#allocation5], 32
    $region85: #{tpu_custom_call.1} parent=1 // pred_fallthru
      _
    // Predicated region
    $region86: #{tpu_custom_call.1} parent=1 // pred_check
      _
    $region87: #{tpu_custom_call.1} parent=1 // pred_check_branch
      %242 = sbr.rel (0) target = $region89
    $region88: #{tpu_custom_call.1} parent=1 // pred_region
      %244 = dma.done [#allocation5], 32
    $region89: #{tpu_custom_call.1} parent=1 // pred_fallthru
      _
    // Predicated region
    $region90: #{tpu_custom_call.1} parent=1 // pred_check
      _
    $region91: #{tpu_custom_call.1} parent=1 // pred_check_branch
      %246 = sbr.rel (0) target = $region93
    $region92: #{tpu_custom_call.1} parent=1 // pred_region
      %248 = dma.done [#allocation8], 32
    $region93: #{tpu_custom_call.1} parent=1 // pred_fallthru
      _
    // Predicated region
    $region94: #{tpu_custom_call.1} parent=1 // pred_check
      _
    $region95: #{tpu_custom_call.1} parent=1 // pred_check_branch
      %250 = sbr.rel (0) target = $region97
    $region96: #{tpu_custom_call.1} parent=1 // pred_region
      %252 = dma.done [#allocation8], 512
    $region97: #{tpu_custom_call.1} parent=1 // pred_fallthru
      _
    // Predicated region
    $region98: #{tpu_custom_call.1} parent=1 // pred_check
      _
    $region99: #{tpu_custom_call.1} parent=1 // pred_check_branch
      %254 = sbr.rel (0) target = $region101
    $region100: #{tpu_custom_call.1} parent=1 // pred_region
      %256 = dma.done [#allocation11], 32
    $region101: #{tpu_custom_call.1} parent=1 // pred_fallthru
      _
    // Predicated region
    $region102: #{tpu_custom_call.1} parent=1 // pred_check
      _
    $region103: #{tpu_custom_call.1} parent=1 // pred_check_branch
      %258 = sbr.rel (0) target = $region105
    $region104: #{tpu_custom_call.1} parent=1 // pred_region
      %260 = dma.done [#allocation11], 512
    $region105: #{tpu_custom_call.1} parent=1 // pred_fallthru
      _
    // Predicated region
    $region106: #{tpu_custom_call.1} parent=1 // pred_check
      _
    $region107: #{tpu_custom_call.1} parent=1 // pred_check_branch
      %262 = sbr.rel (0) target = $region109
    $region108: #{tpu_custom_call.1} parent=1 // pred_region
      %264 = dma.done [#allocation14], 32
    $region109: #{tpu_custom_call.1} parent=1 // pred_fallthru
      _
    // Predicated region
    $region110: #{tpu_custom_call.1} parent=1 // pred_check
      _
    $region111: #{tpu_custom_call.1} parent=1 // pred_check_branch
      %266 = sbr.rel (0) target = $region113
    $region112: #{tpu_custom_call.1} parent=1 // pred_region
      %268 = dma.done [#allocation14], 512
    $region113: #{tpu_custom_call.1} parent=1 // pred_fallthru
      _
    // Predicated region
    $region114: #{tpu_custom_call.1} parent=1 // pred_check
      _
    $region115: #{tpu_custom_call.1} parent=1 // pred_check_branch
      %270 = sbr.rel (0) target = $region117
    $region116: #{tpu_custom_call.1} parent=1 // pred_region
      %272 = dma.done [#allocation17], 32
    $region117: #{tpu_custom_call.1} parent=1 // pred_fallthru
      _
    // Predicated region
    $region118: #{tpu_custom_call.1} parent=1 // pred_check
      _
    $region119: #{tpu_custom_call.1} parent=1 // pred_check_branch
      %274 = sbr.rel (0) target = $region121
    $region120: #{tpu_custom_call.1} parent=1 // pred_region
      %276 = dma.done [#allocation17], 32
    $region121: #{tpu_custom_call.1} parent=1 // pred_fallthru
      _
    // Predicated region
    $region122: #{tpu_custom_call.1} parent=1 // pred_check
      _
    $region123: #{tpu_custom_call.1} parent=1 // pred_check_branch
      %278 = sbr.rel (0) target = $region125
    $region124: #{tpu_custom_call.1} parent=1 // pred_region
      %280 = dma.done [#allocation20], 32
    $region125: #{tpu_custom_call.1} parent=1 // pred_fallthru
      _
    // Predicated region
    $region126: #{tpu_custom_call.1} parent=1 // pred_check
      _
    $region127: #{tpu_custom_call.1} parent=1 // pred_check_branch
      %282 = sbr.rel (0) target = $region129
    $region128: #{tpu_custom_call.1} parent=1 // pred_region
      %284 = dma.done [#allocation20], 512
    $region129: #{tpu_custom_call.1} parent=1 // pred_fallthru
      _
    // Predicated region
    $region130: #{tpu_custom_call.1} parent=1 // pred_check
      _
    $region131: #{tpu_custom_call.1} parent=1 // pred_check_branch
      %286 = sbr.rel (0) target = $region133
    $region132: #{tpu_custom_call.1} parent=1 // pred_region
      %288 = dma.done [#allocation23], 32
    $region133: #{tpu_custom_call.1} parent=1 // pred_fallthru
      _
    // Predicated region
    $region134: #{tpu_custom_call.1} parent=1 // pred_check
      _
    $region135: #{tpu_custom_call.1} parent=1 // pred_check_branch
      %290 = sbr.rel (0) target = $region137
    $region136: #{tpu_custom_call.1} parent=1 // pred_region
      %292 = dma.done [#allocation23], 32
    $region137: #{tpu_custom_call.1} parent=1 // pred_fallthru
      _
    %v294 = vld [vmem:[%s1] sm:$0xff]
    %v295 = vld [vmem:[%s1 + $0x8] sm:$0xff]
    %v296 = vld [vmem:[#allocation2] sm:$0xff]
    %v297 = vld [vmem:[#allocation2 + $0x8] sm:$0xff]
    %299 = vset.pattern.permute.xlu0 0
    %300 = vperm.xlu0 %299, %v294
    %v301 = vpop.permute.xlu0 %300
    %304 = vset.pattern.permute.xlu0 0
    %305 = vperm.xlu0 %304, %v295
    %v306 = vpop.permute.xlu0 %305
    %v308 = vmul.f32 %v296, %v301
    %v309 = vmul.f32 %v297, %v306
    %v310 = vlaneseq
    %v311 = vshrl.u32 %v310, 7
    %v312 = vlaneseq
    %v313 = vand.u32 %v312, 127
    %vm314 = vcmp.le.s32.totalorder %v313, %v311
    %v315 = vsel %vm314, 0.0, -1e+30
    %v316 = vld [vmem:[#allocation6] sm:$0x1]
    %v317 = vld [vmem:[#allocation7] sm:$0x1]
    %vm318 = vcmask 261120
    %v319 = vsel %vm318, %v308, 0.0
    %320 = vadd.xlane.f32.xlu0 %v319
    %v321 = vpop.xlane.xlu0 %320
    %v322 = vsel %vm318, %v309, 0.0
    %323 = vadd.xlane.f32.xlu0 %v322
    %v324 = vpop.xlane.xlu0 %323
    %v325 = vrcp.pop 32.0
    %v326 = vmul.f32 32.0, %v325
    %v327 = vsub.f32 1.0, %v326
    %v328 = vmul.f32 %v325, %v327
    %v329 = vadd.f32 %v325, %v328
    %vm330 = vweird.f32 %v325
    %v331 = vsel %vm330, %v325, %v329
    %v332 = vmul.f32 %v321, %v331
    %v333 = vmul.f32 %v324, %v331
    %v334 = vsub.f32 %v308, %v332
    %v335 = vsub.f32 %v309, %v333
    %v336 = vmul.f32 %v334, %v334
    %v337 = vmul.f32 %v335, %v335
    %v338 = vsel %vm318, %v336, 0.0
    %339 = vadd.xlane.f32.xlu0 %v338
    %v340 = vpop.xlane.xlu0 %339
    %v341 = vsel %vm318, %v337, 0.0
    %342 = vadd.xlane.f32.xlu0 %v341
    %v343 = vpop.xlane.xlu0 %342
    %v344 = vmul.f32 %v340, %v331
    %v345 = vmul.f32 %v343, %v331
    %v346 = vadd.f32 %v344, 1e-08
    %v347 = vadd.f32 %v345, 1e-08
    %v348 = vrsqrt.pop %v346
    %v349 = vmul.f32 %v348, %v346
    %v350 = vmul.f32 %v349, %v348
    %v351 = vmul.f32 0.5, %v350
    %v352 = vsub.f32 1.5, %v351
    %v353 = vmul.f32 %v348, %v352
    %vm354 = vweird.f32 %v346
    %vm355 = vweird.f32 %v348
    %vm356 = vmor %vm354, %vm355
    %v357 = vsel %vm356, %v348, %v353
    %v358 = vrsqrt.pop %v347
    %v359 = vmul.f32 %v358, %v347
    %v360 = vmul.f32 %v359, %v358
    %v361 = vmul.f32 0.5, %v360
    %v362 = vsub.f32 1.5, %v361
    %v363 = vmul.f32 %v358, %v362
    %vm364 = vweird.f32 %v347
    %vm365 = vweird.f32 %v358
    %vm366 = vmor %vm364, %vm365
    %v367 = vsel %vm366, %v358, %v363
    %v368 = vmul.f32 %v334, %v357
    %v369 = vmul.f32 %v335, %v367
    %v371 = vperm.slane %v316, 0
    %v373 = vmul.f32 %v368, %v371
    %v374 = vmul.f32 %v369, %v371
    %v376 = vperm.slane %v317, 0
    %v378 = vadd.f32 %v373, %v376
    %v379 = vadd.f32 %v374, %v376
    %v380 = vpack.c.bf16 %v379, %v378
    %v381 = vld [vmem:[#allocation9] sm:$0xf]
    %v382 = vld [vmem:[#allocation9 + $0x4] sm:$0xf]
    %v383 = vld [vmem:[#allocation9 + $0x8] sm:$0xf]
    %v384 = vld [vmem:[#allocation9 + $0xc] sm:$0xf]
    %v385 = vld [vmem:[#allocation10] sm:$0x1]
    %v387 = vperm.slane %v385, 0
    %v393 = vunpack.c.l.b16 %v381
    %v394 = vunpack.c.l.b16 %v382
    %v395 = vunpack.c.l.b16 %v383
    %v396 = vunpack.c.l.b16 %v384
    %v397 = vpack.c.b16 %v394, %v393
    %v398 = vpack.c.b16 %v396, %v395
    %v402 = vsel %vm318, %v380, 0
    %404 = vmatpush.bf16.msra.mxu0 0
    %405 = vmatpush.bf16.msra.mxu0 0
    %406 = vmatpush.bf16.msra.mxu0 0
    %407 = vmatpush.bf16.msra.mxu0 0
    %408 = vmatpush.bf16.msra.mxu0 0
    %409 = vmatpush.bf16.msra.mxu0 0
    %410 = vmatpush.bf16.msra.mxu0 %v398
    %411 = vmatpush.bf16.msra.mxu0 %v397
    %412 = vmatmul.bf16.gmra.mxu0 %v402
    %v413 = vpop.f32.mrf.mxu0
    %v414 = vadd.f32 %v387, %v413
    %v415 = vpop.f32.mrf.mxu0
    %v416 = vadd.f32 %v387, %v415
    %417 = vdwg.mxu0
    %v418 = vpack.c.bf16 %v309, %v308
    %v419 = vld [vmem:[#allocation12] sm:$0xf]
    %v420 = vld [vmem:[#allocation12 + $0x4] sm:$0xf]
    %v421 = vld [vmem:[#allocation12 + $0x8] sm:$0xf]
    %v422 = vld [vmem:[#allocation12 + $0xc] sm:$0xf]
    %v423 = vld [vmem:[#allocation13] sm:$0x1]
    %v425 = vperm.slane %v423, 0
    %v431 = vunpack.c.l.b16 %v419
    %v432 = vunpack.c.l.b16 %v420
    %v433 = vunpack.c.l.b16 %v421
    %v434 = vunpack.c.l.b16 %v422
    %v435 = vpack.c.b16 %v432, %v431
    %v436 = vpack.c.b16 %v434, %v433
    %v440 = vsel %vm318, %v418, 0
    %442 = vmatpush.bf16.msra.mxu0 0
    %443 = vmatpush.bf16.msra.mxu0 0
    %444 = vmatpush.bf16.msra.mxu0 0
    %445 = vmatpush.bf16.msra.mxu0 0
    %446 = vmatpush.bf16.msra.mxu0 0
    %447 = vmatpush.bf16.msra.mxu0 0
    %448 = vmatpush.bf16.msra.mxu0 %v436
    %449 = vmatpush.bf16.msra.mxu0 %v435
    %450 = vmatmul.bf16.gmra.mxu0 %v440
    %v451 = vpop.f32.mrf.mxu0
    %v452 = vadd.f32 %v425, %v451
    %v453 = vpop.f32.mrf.mxu0
    %v454 = vadd.f32 %v425, %v453
    %455 = vdwg.mxu0
    %v456 = vpack.c.bf16 %v414, %v414
    %v457 = vpack.c.bf16 %v416, %v416
    %v458 = vpack.c.bf16 %v452, %v452
    %v459 = vpack.c.bf16 %v454, %v454
    %vm460 = vcmask 64512
    %v462 = vsel %vm460, %v456, 0
    %v465 = vsel %vm460, %v458, 0
    %467 = vmatpush.bf16.xpose.msra.mxu0 0
    %468 = vmatpush.bf16.xpose.msra.mxu0 0
    %469 = vmatpush.bf16.xpose.msra.mxu0 0
    %470 = vmatpush.bf16.xpose.msra.mxu0 0
    %471 = vmatpush.bf16.xpose.msra.mxu0 0
    %472 = vmatpush.bf16.xpose.msra.mxu0 0
    %473 = vmatpush.bf16.xpose.msra.mxu0 0
    %474 = vmatpush.bf16.xpose.msra.mxu0 %v465
    %475 = vmatmul.bf16.gmra.mxu0 %v462
    %v476 = vpop.f32.mrf.mxu0
    %v477 = vadd.f32 %v315, %v476
    %v478 = vpop.f32.mrf.mxu0
    %479 = vdwg.mxu0
    %v481 = vsel %vm460, %v457, 0
    %v484 = vsel %vm460, %v459, 0
    %486 = vmatpush.bf16.xpose.msra.mxu0 0
    %487 = vmatpush.bf16.xpose.msra.mxu0 0
    %488 = vmatpush.bf16.xpose.msra.mxu0 0
    %489 = vmatpush.bf16.xpose.msra.mxu0 0
    %490 = vmatpush.bf16.xpose.msra.mxu0 0
    %491 = vmatpush.bf16.xpose.msra.mxu0 0
    %492 = vmatpush.bf16.xpose.msra.mxu0 0
    %493 = vmatpush.bf16.xpose.msra.mxu0 %v484
    %494 = vmatmul.bf16.gmra.mxu0 %v481
    %v495 = vpop.f32.mrf.mxu0
    %v496 = vadd.f32 %v315, %v495
    %v497 = vpop.f32.mrf.mxu0
    %498 = vdwg.mxu0
    %v499 = vsel %vm460, %v477, -inf
    %500 = vmax.xlane.f32.xlu0 %v499
    %v501 = vpop.xlane.xlu0 %500
    %v502 = vsel %vm460, %v496, -inf
    %503 = vmax.xlane.f32.xlu0 %v502
    %v504 = vpop.xlane.xlu0 %503
    %v505 = vsub.f32 %v477, %v501
    %v506 = vsub.f32 %v496, %v504
    %v507 = vmul.f32 %v505, 1.442695
    %v508 = vpow.pop %v507
    %v509 = vmul.f32 %v506, 1.442695
    %v510 = vpow.pop %v509
    %v511 = vsel %vm460, %v508, 0.0
    %512 = vadd.xlane.f32.xlu0 %v511
    %v513 = vpop.xlane.xlu0 %512
    %v514 = vsel %vm460, %v510, 0.0
    %515 = vadd.xlane.f32.xlu0 %v514
    %v516 = vpop.xlane.xlu0 %515
    %v517 = vrcp.pop %v513
    %v518 = vrcp.pop %v516
    %v519 = vmul.f32 %v508, %v517
    %v520 = vmul.f32 %v510, %v518
    %v521 = vpack.c.bf16 %v519, %v519
    %v522 = vpack.c.bf16 %v520, %v520
    %v524 = vunpack.c.l.b16 %v458
    %v525 = vpack.c.b16 %v524, %v524
    %526 = vrot.lane.b32.xlu0 %v525, 96
    %v527 = vpop.permute.xlu0 %526
    %v529 = vsel %vm460, %v521, 0
    %vm531 = vcmask 1043456
    %v533 = vsel %vm531, %v527, 0
    %535 = vmatpush.bf16.msra.mxu0 0
    %536 = vmatpush.bf16.msra.mxu0 0
    %537 = vmatpush.bf16.msra.mxu0 0
    %538 = vmatpush.bf16.msra.mxu0 0
    %539 = vmatpush.bf16.msra.mxu0 0
    %540 = vmatpush.bf16.msra.mxu0 0
    %541 = vmatpush.bf16.msra.mxu0 0
    %542 = vmatpush.bf16.msra.mxu0 %v533
    %543 = vmatmul.bf16.gmra.mxu0 %v529
    %v544 = vpop.f32.mrf.mxu0
    %v545 = vadd.f32 0.0, %v544
    %v546 = vpop.f32.mrf.mxu0
    %547 = vdwg.mxu0
    %v549 = vunpack.c.l.b16 %v459
    %v550 = vpack.c.b16 %v549, %v549
    %551 = vrot.lane.b32.xlu0 %v550, 96
    %v552 = vpop.permute.xlu0 %551
    %v554 = vsel %vm460, %v522, 0
    %v557 = vsel %vm531, %v552, 0
    %559 = vmatpush.bf16.msra.mxu0 0
    %560 = vmatpush.bf16.msra.mxu0 0
    %561 = vmatpush.bf16.msra.mxu0 0
    %562 = vmatpush.bf16.msra.mxu0 0
    %563 = vmatpush.bf16.msra.mxu0 0
    %564 = vmatpush.bf16.msra.mxu0 0
    %565 = vmatpush.bf16.msra.mxu0 0
    %566 = vmatpush.bf16.msra.mxu0 %v557
    %567 = vmatmul.bf16.gmra.mxu0 %v554
    %v568 = vpop.f32.mrf.mxu0
    %v569 = vadd.f32 0.0, %v568
    %v570 = vpop.f32.mrf.mxu0
    %571 = vdwg.mxu0
    %v573 = vunpack.c.l.b16 %v456
    %v574 = vpack.c.b16 %v573, %v573
    %575 = vrot.lane.b32.xlu0 %v574, 120
    %v576 = vpop.permute.xlu0 %575
    %577 = vrot.lane.b32.xlu0 %v525, 120
    %v578 = vpop.permute.xlu0 %577
    %v580 = vsel %vm460, %v576, 0
    %v583 = vsel %vm460, %v578, 0
    %585 = vmatpush.bf16.xpose.msra.mxu0 0
    %586 = vmatpush.bf16.xpose.msra.mxu0 0
    %587 = vmatpush.bf16.xpose.msra.mxu0 0
    %588 = vmatpush.bf16.xpose.msra.mxu0 0
    %589 = vmatpush.bf16.xpose.msra.mxu0 0
    %590 = vmatpush.bf16.xpose.msra.mxu0 0
    %591 = vmatpush.bf16.xpose.msra.mxu0 0
    %592 = vmatpush.bf16.xpose.msra.mxu0 %v583
    %593 = vmatmul.bf16.gmra.mxu0 %v580
    %v594 = vpop.f32.mrf.mxu0
    %v595 = vadd.f32 %v315, %v594
    %v596 = vpop.f32.mrf.mxu0
    %597 = vdwg.mxu0
    %v599 = vunpack.c.l.b16 %v457
    %v600 = vpack.c.b16 %v599, %v599
    %601 = vrot.lane.b32.xlu0 %v600, 120
    %v602 = vpop.permute.xlu0 %601
    %603 = vrot.lane.b32.xlu0 %v550, 120
    %v604 = vpop.permute.xlu0 %603
    %v606 = vsel %vm460, %v602, 0
    %v609 = vsel %vm460, %v604, 0
    %611 = vmatpush.bf16.xpose.msra.mxu0 0
    %612 = vmatpush.bf16.xpose.msra.mxu0 0
    %613 = vmatpush.bf16.xpose.msra.mxu0 0
    %614 = vmatpush.bf16.xpose.msra.mxu0 0
    %615 = vmatpush.bf16.xpose.msra.mxu0 0
    %616 = vmatpush.bf16.xpose.msra.mxu0 0
    %617 = vmatpush.bf16.xpose.msra.mxu0 0
    %618 = vmatpush.bf16.xpose.msra.mxu0 %v609
    %619 = vmatmul.bf16.gmra.mxu0 %v606
    %v620 = vpop.f32.mrf.mxu0
    %v621 = vadd.f32 %v315, %v620
    %v622 = vpop.f32.mrf.mxu0
    %623 = vdwg.mxu0
    %v624 = vsel %vm460, %v595, -inf
    %625 = vmax.xlane.f32.xlu0 %v624
    %v626 = vpop.xlane.xlu0 %625
    %v627 = vsel %vm460, %v621, -inf
    %628 = vmax.xlane.f32.xlu0 %v627
    %v629 = vpop.xlane.xlu0 %628
    %v630 = vsub.f32 %v595, %v626
    %v631 = vsub.f32 %v621, %v629
    %v632 = vmul.f32 %v630, 1.442695
    %v633 = vpow.pop %v632
    %v634 = vmul.f32 %v631, 1.442695
    %v635 = vpow.pop %v634
    %v636 = vsel %vm460, %v633, 0.0
    %637 = vadd.xlane.f32.xlu0 %v636
    %v638 = vpop.xlane.xlu0 %637
    %v639 = vsel %vm460, %v635, 0.0
    %640 = vadd.xlane.f32.xlu0 %v639
    %v641 = vpop.xlane.xlu0 %640
    %v642 = vrcp.pop %v638
    %v643 = vrcp.pop %v641
    %v644 = vmul.f32 %v633, %v642
    %v645 = vmul.f32 %v635, %v643
    %v646 = vpack.c.bf16 %v644, %v644
    %v647 = vpack.c.bf16 %v645, %v645
    %648 = vrot.lane.b32.xlu0 %v525, 88
    %v649 = vpop.permute.xlu0 %648
    %v651 = vsel %vm460, %v646, 0
    %v654 = vsel %vm531, %v649, 0
    %656 = vmatpush.bf16.msra.mxu0 0
    %657 = vmatpush.bf16.msra.mxu0 0
    %658 = vmatpush.bf16.msra.mxu0 0
    %659 = vmatpush.bf16.msra.mxu0 0
    %660 = vmatpush.bf16.msra.mxu0 0
    %661 = vmatpush.bf16.msra.mxu0 0
    %662 = vmatpush.bf16.msra.mxu0 0
    %663 = vmatpush.bf16.msra.mxu0 %v654
    %664 = vmatmul.bf16.gmra.mxu0 %v651
    %v665 = vpop.f32.mrf.mxu0
    %v666 = vadd.f32 0.0, %v665
    %v667 = vpop.f32.mrf.mxu0
    %668 = vdwg.mxu0
    %669 = vrot.lane.b32.xlu0 %v550, 88
    %v670 = vpop.permute.xlu0 %669
    %v672 = vsel %vm460, %v647, 0
    %v675 = vsel %vm531, %v670, 0
    %677 = vmatpush.bf16.msra.mxu0 0
    %678 = vmatpush.bf16.msra.mxu0 0
    %679 = vmatpush.bf16.msra.mxu0 0
    %680 = vmatpush.bf16.msra.mxu0 0
    %681 = vmatpush.bf16.msra.mxu0 0
    %682 = vmatpush.bf16.msra.mxu0 0
    %683 = vmatpush.bf16.msra.mxu0 0
    %684 = vmatpush.bf16.msra.mxu0 %v675
    %685 = vmatmul.bf16.gmra.mxu0 %v672
    %v686 = vpop.f32.mrf.mxu0
    %v687 = vadd.f32 0.0, %v686
    %v688 = vpop.f32.mrf.mxu0
    %689 = vdwg.mxu0
    %690 = vrot.lane.b32.xlu0 %v574, 112
    %v691 = vpop.permute.xlu0 %690
    %692 = vrot.lane.b32.xlu0 %v525, 112
    %v693 = vpop.permute.xlu0 %692
    %v695 = vsel %vm460, %v691, 0
    %v698 = vsel %vm460, %v693, 0
    %700 = vmatpush.bf16.xpose.msra.mxu0 0
    %701 = vmatpush.bf16.xpose.msra.mxu0 0
    %702 = vmatpush.bf16.xpose.msra.mxu0 0
    %703 = vmatpush.bf16.xpose.msra.mxu0 0
    %704 = vmatpush.bf16.xpose.msra.mxu0 0
    %705 = vmatpush.bf16.xpose.msra.mxu0 0
    %706 = vmatpush.bf16.xpose.msra.mxu0 0
    %707 = vmatpush.bf16.xpose.msra.mxu0 %v698
    %708 = vmatmul.bf16.gmra.mxu0 %v695
    %v709 = vpop.f32.mrf.mxu0
    %v710 = vadd.f32 %v315, %v709
    %v711 = vpop.f32.mrf.mxu0
    %712 = vdwg.mxu0
    %713 = vrot.lane.b32.xlu0 %v600, 112
    %v714 = vpop.permute.xlu0 %713
    %715 = vrot.lane.b32.xlu0 %v550, 112
    %v716 = vpop.permute.xlu0 %715
    %v718 = vsel %vm460, %v714, 0
    %v721 = vsel %vm460, %v716, 0
    %723 = vmatpush.bf16.xpose.msra.mxu0 0
    %724 = vmatpush.bf16.xpose.msra.mxu0 0
    %725 = vmatpush.bf16.xpose.msra.mxu0 0
    %726 = vmatpush.bf16.xpose.msra.mxu0 0
    %727 = vmatpush.bf16.xpose.msra.mxu0 0
    %728 = vmatpush.bf16.xpose.msra.mxu0 0
    %729 = vmatpush.bf16.xpose.msra.mxu0 0
    %730 = vmatpush.bf16.xpose.msra.mxu0 %v721
    %731 = vmatmul.bf16.gmra.mxu0 %v718
    %v732 = vpop.f32.mrf.mxu0
    %v733 = vadd.f32 %v315, %v732
    %v734 = vpop.f32.mrf.mxu0
    %735 = vdwg.mxu0
    %v736 = vsel %vm460, %v710, -inf
    %737 = vmax.xlane.f32.xlu0 %v736
    %v738 = vpop.xlane.xlu0 %737
    %v739 = vsel %vm460, %v733, -inf
    %740 = vmax.xlane.f32.xlu0 %v739
    %v741 = vpop.xlane.xlu0 %740
    %v742 = vsub.f32 %v710, %v738
    %v743 = vsub.f32 %v733, %v741
    %v744 = vmul.f32 %v742, 1.442695
    %v745 = vpow.pop %v744
    %v746 = vmul.f32 %v743, 1.442695
    %v747 = vpow.pop %v746
    %v748 = vsel %vm460, %v745, 0.0
    %749 = vadd.xlane.f32.xlu0 %v748
    %v750 = vpop.xlane.xlu0 %749
    %v751 = vsel %vm460, %v747, 0.0
    %752 = vadd.xlane.f32.xlu0 %v751
    %v753 = vpop.xlane.xlu0 %752
    %v754 = vrcp.pop %v750
    %v755 = vrcp.pop %v753
    %v756 = vmul.f32 %v745, %v754
    %v757 = vmul.f32 %v747, %v755
    %v758 = vpack.c.bf16 %v756, %v756
    %v759 = vpack.c.bf16 %v757, %v757
    %760 = vrot.lane.b32.xlu0 %v525, 80
    %v761 = vpop.permute.xlu0 %760
    %v763 = vsel %vm460, %v758, 0
    %v766 = vsel %vm531, %v761, 0
    %768 = vmatpush.bf16.msra.mxu0 0
    %769 = vmatpush.bf16.msra.mxu0 0
    %770 = vmatpush.bf16.msra.mxu0 0
    %771 = vmatpush.bf16.msra.mxu0 0
    %772 = vmatpush.bf16.msra.mxu0 0
    %773 = vmatpush.bf16.msra.mxu0 0
    %774 = vmatpush.bf16.msra.mxu0 0
    %775 = vmatpush.bf16.msra.mxu0 %v766
    %776 = vmatmul.bf16.gmra.mxu0 %v763
    %v777 = vpop.f32.mrf.mxu0
    %v778 = vadd.f32 0.0, %v777
    %v779 = vpop.f32.mrf.mxu0
    %780 = vdwg.mxu0
    %781 = vrot.lane.b32.xlu0 %v550, 80
    %v782 = vpop.permute.xlu0 %781
    %v784 = vsel %vm460, %v759, 0
    %v787 = vsel %vm531, %v782, 0
    %789 = vmatpush.bf16.msra.mxu0 0
    %790 = vmatpush.bf16.msra.mxu0 0
    %791 = vmatpush.bf16.msra.mxu0 0
    %792 = vmatpush.bf16.msra.mxu0 0
    %793 = vmatpush.bf16.msra.mxu0 0
    %794 = vmatpush.bf16.msra.mxu0 0
    %795 = vmatpush.bf16.msra.mxu0 0
    %796 = vmatpush.bf16.msra.mxu0 %v787
    %797 = vmatmul.bf16.gmra.mxu0 %v784
    %v798 = vpop.f32.mrf.mxu0
    %v799 = vadd.f32 0.0, %v798
    %v800 = vpop.f32.mrf.mxu0
    %801 = vdwg.mxu0
    %802 = vrot.lane.b32.xlu0 %v574, 104
    %v803 = vpop.permute.xlu0 %802
    %804 = vrot.lane.b32.xlu0 %v525, 104
    %v805 = vpop.permute.xlu0 %804
    %v807 = vsel %vm460, %v803, 0
    %v810 = vsel %vm460, %v805, 0
    %812 = vmatpush.bf16.xpose.msra.mxu0 0
    %813 = vmatpush.bf16.xpose.msra.mxu0 0
    %814 = vmatpush.bf16.xpose.msra.mxu0 0
    %815 = vmatpush.bf16.xpose.msra.mxu0 0
    %816 = vmatpush.bf16.xpose.msra.mxu0 0
    %817 = vmatpush.bf16.xpose.msra.mxu0 0
    %818 = vmatpush.bf16.xpose.msra.mxu0 0
    %819 = vmatpush.bf16.xpose.msra.mxu0 %v810
    %820 = vmatmul.bf16.gmra.mxu0 %v807
    %v821 = vpop.f32.mrf.mxu0
    %v822 = vadd.f32 %v315, %v821
    %v823 = vpop.f32.mrf.mxu0
    %824 = vdwg.mxu0
    %825 = vrot.lane.b32.xlu0 %v600, 104
    %v826 = vpop.permute.xlu0 %825
    %827 = vrot.lane.b32.xlu0 %v550, 104
    %v828 = vpop.permute.xlu0 %827
    %v830 = vsel %vm460, %v826, 0
    %v833 = vsel %vm460, %v828, 0
    %835 = vmatpush.bf16.xpose.msra.mxu0 0
    %836 = vmatpush.bf16.xpose.msra.mxu0 0
    %837 = vmatpush.bf16.xpose.msra.mxu0 0
    %838 = vmatpush.bf16.xpose.msra.mxu0 0
    %839 = vmatpush.bf16.xpose.msra.mxu0 0
    %840 = vmatpush.bf16.xpose.msra.mxu0 0
    %841 = vmatpush.bf16.xpose.msra.mxu0 0
    %842 = vmatpush.bf16.xpose.msra.mxu0 %v833
    %843 = vmatmul.bf16.gmra.mxu0 %v830
    %v844 = vpop.f32.mrf.mxu0
    %v845 = vadd.f32 %v315, %v844
    %v846 = vpop.f32.mrf.mxu0
    %847 = vdwg.mxu0
    %v848 = vsel %vm460, %v822, -inf
    %849 = vmax.xlane.f32.xlu0 %v848
    %v850 = vpop.xlane.xlu0 %849
    %v851 = vsel %vm460, %v845, -inf
    %852 = vmax.xlane.f32.xlu0 %v851
    %v853 = vpop.xlane.xlu0 %852
    %v854 = vsub.f32 %v822, %v850
    %v855 = vsub.f32 %v845, %v853
    %v856 = vmul.f32 %v854, 1.442695
    %v857 = vpow.pop %v856
    %v858 = vmul.f32 %v855, 1.442695
    %v859 = vpow.pop %v858
    %v860 = vsel %vm460, %v857, 0.0
    %861 = vadd.xlane.f32.xlu0 %v860
    %v862 = vpop.xlane.xlu0 %861
    %v863 = vsel %vm460, %v859, 0.0
    %864 = vadd.xlane.f32.xlu0 %v863
    %v865 = vpop.xlane.xlu0 %864
    %v866 = vrcp.pop %v862
    %v867 = vrcp.pop %v865
    %v868 = vmul.f32 %v857, %v866
    %v869 = vmul.f32 %v859, %v867
    %v870 = vpack.c.bf16 %v868, %v868
    %v871 = vpack.c.bf16 %v869, %v869
    %872 = vrot.lane.b32.xlu0 %v525, 72
    %v873 = vpop.permute.xlu0 %872
    %v875 = vsel %vm460, %v870, 0
    %v878 = vsel %vm531, %v873, 0
    %880 = vmatpush.bf16.msra.mxu0 0
    %881 = vmatpush.bf16.msra.mxu0 0
    %882 = vmatpush.bf16.msra.mxu0 0
    %883 = vmatpush.bf16.msra.mxu0 0
    %884 = vmatpush.bf16.msra.mxu0 0
    %885 = vmatpush.bf16.msra.mxu0 0
    %886 = vmatpush.bf16.msra.mxu0 0
    %887 = vmatpush.bf16.msra.mxu0 %v878
    %888 = vmatmul.bf16.gmra.mxu0 %v875
    %v889 = vpop.f32.mrf.mxu0
    %v890 = vadd.f32 0.0, %v889
    %v891 = vpop.f32.mrf.mxu0
    %892 = vdwg.mxu0
    %893 = vrot.lane.b32.xlu0 %v550, 72
    %v894 = vpop.permute.xlu0 %893
    %v896 = vsel %vm460, %v871, 0
    %v899 = vsel %vm531, %v894, 0
    %901 = vmatpush.bf16.msra.mxu0 0
    %902 = vmatpush.bf16.msra.mxu0 0
    %903 = vmatpush.bf16.msra.mxu0 0
    %904 = vmatpush.bf16.msra.mxu0 0
    %905 = vmatpush.bf16.msra.mxu0 0
    %906 = vmatpush.bf16.msra.mxu0 0
    %907 = vmatpush.bf16.msra.mxu0 0
    %908 = vmatpush.bf16.msra.mxu0 %v899
    %909 = vmatmul.bf16.gmra.mxu0 %v896
    %v910 = vpop.f32.mrf.mxu0
    %v911 = vadd.f32 0.0, %v910
    %v912 = vpop.f32.mrf.mxu0
    %913 = vdwg.mxu0
    %916 = vrot.lane.b32.xlu0 %v666, 8
    %v917 = vpop.permute.xlu0 %916
    %918 = vrot.lane.b32.xlu0 %v687, 8
    %v919 = vpop.permute.xlu0 %918
    %924 = vrot.lane.b32.xlu0 %v778, 16
    %v925 = vpop.permute.xlu0 %924
    %926 = vrot.lane.b32.xlu0 %v799, 16
    %v927 = vpop.permute.xlu0 %926
    %932 = vrot.lane.b32.xlu0 %v890, 24
    %v933 = vpop.permute.xlu0 %932
    %934 = vrot.lane.b32.xlu0 %v911, 24
    %v935 = vpop.permute.xlu0 %934
    %v938 = vsel %vm460, %v545, %v917
    %v939 = vsel %vm460, %v569, %v919
    %vm940 = vcmask 130048
    %v941 = vsel %vm940, %v938, %v925
    %v942 = vsel %vm940, %v939, %v927
    %vm943 = vcmask 195584
    %v944 = vsel %vm943, %v941, %v933
    %v945 = vsel %vm943, %v942, %v935
    %v946 = vpack.c.bf16 %v945, %v944
    %v947 = vld [vmem:[#allocation15] sm:$0xf]
    %v948 = vld [vmem:[#allocation15 + $0x4] sm:$0xf]
    %v949 = vld [vmem:[#allocation15 + $0x8] sm:$0xf]
    %v950 = vld [vmem:[#allocation15 + $0xc] sm:$0xf]
    %v951 = vld [vmem:[#allocation16] sm:$0x1]
    %v953 = vperm.slane %v951, 0
    %v959 = vunpack.c.l.b16 %v947
    %v960 = vunpack.c.l.b16 %v948
    %v961 = vunpack.c.l.b16 %v949
    %v962 = vunpack.c.l.b16 %v950
    %v963 = vpack.c.b16 %v960, %v959
    %v964 = vpack.c.b16 %v962, %v961
    %v968 = vsel %vm318, %v946, 0
    %970 = vmatpush.bf16.msra.mxu0 0
    %971 = vmatpush.bf16.msra.mxu0 0
    %972 = vmatpush.bf16.msra.mxu0 0
    %973 = vmatpush.bf16.msra.mxu0 0
    %974 = vmatpush.bf16.msra.mxu0 0
    %975 = vmatpush.bf16.msra.mxu0 0
    %976 = vmatpush.bf16.msra.mxu0 %v964
    %977 = vmatpush.bf16.msra.mxu0 %v963
    %978 = vmatmul.bf16.gmra.mxu0 %v968
    %v979 = vpop.f32.mrf.mxu0
    %v980 = vadd.f32 %v953, %v979
    %v981 = vpop.f32.mrf.mxu0
    %v982 = vadd.f32 %v953, %v981
    %983 = vdwg.mxu0
    %v984 = vadd.f32 %v378, %v980
    %v985 = vadd.f32 %v379, %v982
    %v986 = vld [vmem:[#allocation18] sm:$0x1]
    %v987 = vld [vmem:[#allocation19] sm:$0x1]
    %v988 = vsel %vm318, %v984, 0.0
    %989 = vadd.xlane.f32.xlu0 %v988
    %v990 = vpop.xlane.xlu0 %989
    %v991 = vsel %vm318, %v985, 0.0
    %992 = vadd.xlane.f32.xlu0 %v991
    %v993 = vpop.xlane.xlu0 %992
    %v994 = vmul.f32 %v990, %v331
    %v995 = vmul.f32 %v993, %v331
    %v996 = vsub.f32 %v984, %v994
    %v997 = vsub.f32 %v985, %v995
    %v998 = vmul.f32 %v996, %v996
    %v999 = vmul.f32 %v997, %v997
    %v1000 = vsel %vm318, %v998, 0.0
    %1001 = vadd.xlane.f32.xlu0 %v1000
    %v1002 = vpop.xlane.xlu0 %1001
    %v1003 = vsel %vm318, %v999, 0.0
    %1004 = vadd.xlane.f32.xlu0 %v1003
    %v1005 = vpop.xlane.xlu0 %1004
    %v1006 = vmul.f32 %v1002, %v331
    %v1007 = vmul.f32 %v1005, %v331
    %v1008 = vadd.f32 %v1006, 1e-08
    %v1009 = vadd.f32 %v1007, 1e-08
    %v1010 = vrsqrt.pop %v1008
    %v1011 = vmul.f32 %v1010, %v1008
    %v1012 = vmul.f32 %v1011, %v1010
    %v1013 = vmul.f32 0.5, %v1012
    %v1014 = vsub.f32 1.5, %v1013
    %v1015 = vmul.f32 %v1010, %v1014
    %vm1016 = vweird.f32 %v1008
    %vm1017 = vweird.f32 %v1010
    %vm1018 = vmor %vm1016, %vm1017
    %v1019 = vsel %vm1018, %v1010, %v1015
    %v1020 = vrsqrt.pop %v1009
    %v1021 = vmul.f32 %v1020, %v1009
    %v1022 = vmul.f32 %v1021, %v1020
    %v1023 = vmul.f32 0.5, %v1022
    %v1024 = vsub.f32 1.5, %v1023
    %v1025 = vmul.f32 %v1020, %v1024
    %vm1026 = vweird.f32 %v1009
    %vm1027 = vweird.f32 %v1020
    %vm1028 = vmor %vm1026, %vm1027
    %v1029 = vsel %vm1028, %v1020, %v1025
    %v1030 = vmul.f32 %v996, %v1019
    %v1031 = vmul.f32 %v997, %v1029
    %v1033 = vperm.slane %v986, 0
    %v1035 = vmul.f32 %v1030, %v1033
    %v1036 = vmul.f32 %v1031, %v1033
    %v1038 = vperm.slane %v987, 0
    %v1040 = vadd.f32 %v1035, %v1038
    %v1041 = vadd.f32 %v1036, %v1038
    %v1042 = vpack.c.bf16 %v1041, %v1040
    %v1043 = vld [vmem:[#allocation21] sm:$0xf]
    %v1044 = vld [vmem:[#allocation21 + $0x4] sm:$0xf]
    %v1045 = vld [vmem:[#allocation21 + $0x8] sm:$0xf]
    %v1046 = vld [vmem:[#allocation21 + $0xc] sm:$0xf]
    %v1047 = vld [vmem:[#allocation22] sm:$0x1]
    %v1049 = vperm.slane %v1047, 0
    %v1055 = vunpack.c.l.b16 %v1043
    %v1056 = vunpack.c.l.b16 %v1044
    %v1057 = vunpack.c.l.b16 %v1045
    %v1058 = vunpack.c.l.b16 %v1046
    %v1059 = vpack.c.b16 %v1056, %v1055
    %v1060 = vpack.c.b16 %v1058, %v1057
    %v1064 = vsel %vm318, %v1042, 0
    %1066 = vmatpush.bf16.msra.mxu0 0
    %1067 = vmatpush.bf16.msra.mxu0 0
    %1068 = vmatpush.bf16.msra.mxu0 0
    %1069 = vmatpush.bf16.msra.mxu0 0
    %1070 = vmatpush.bf16.msra.mxu0 0
    %1071 = vmatpush.bf16.msra.mxu0 0
    %1072 = vmatpush.bf16.msra.mxu0 %v1060
    %1073 = vmatpush.bf16.msra.mxu0 %v1059
    %1074 = vmatmul.bf16.gmra.mxu0 %v1064
    %v1075 = vpop.f32.mrf.mxu0
    %v1076 = vadd.f32 %v1049, %v1075
    %v1077 = vpop.f32.mrf.mxu0
    %v1078 = vadd.f32 %v1049, %v1077
    %1079 = vdwg.mxu0
    %v1080 = vmax.f32 %v1076, 0.0
    %v1081 = vmax.f32 %v1078, 0.0
    %v1082 = vpack.c.bf16 %v1081, %v1080
    %v1083 = vld [vmem:[%s15] sm:$0xf]
    %v1084 = vld [vmem:[%s15 + $0x4] sm:$0xf]
    %v1085 = vld [vmem:[%s15 + $0x8] sm:$0xf]
    %v1086 = vld [vmem:[%s15 + $0xc] sm:$0xf]
    %v1087 = vld [vmem:[#allocation24] sm:$0x1]
    %v1089 = vperm.slane %v1087, 0
    %v1095 = vunpack.c.l.b16 %v1083
    %v1096 = vunpack.c.l.b16 %v1084
    %v1097 = vunpack.c.l.b16 %v1085
    %v1098 = vunpack.c.l.b16 %v1086
    %v1099 = vpack.c.b16 %v1096, %v1095
    %v1100 = vpack.c.b16 %v1098, %v1097
    %v1104 = vsel %vm318, %v1082, 0
    %1106 = vmatpush.bf16.msra.mxu0 0
    %1107 = vmatpush.bf16.msra.mxu0 0
    %1108 = vmatpush.bf16.msra.mxu0 0
    %1109 = vmatpush.bf16.msra.mxu0 0
    %1110 = vmatpush.bf16.msra.mxu0 0
    %1111 = vmatpush.bf16.msra.mxu0 0
    %1112 = vmatpush.bf16.msra.mxu0 %v1100
    %1113 = vmatpush.bf16.msra.mxu0 %v1099
    %1114 = vmatmul.bf16.gmra.mxu0 %v1104
    %v1115 = vpop.f32.mrf.mxu0
    %v1116 = vadd.f32 %v1089, %v1115
    %v1117 = vpop.f32.mrf.mxu0
    %v1118 = vadd.f32 %v1089, %v1117
    %1119 = vdwg.mxu0
    %v1120 = vadd.f32 %v1040, %v1116
    %v1121 = vadd.f32 %v1041, %v1118
    %v1122 = vmul.f32 %v1120, %v301
    %v1123 = vmul.f32 %v1121, %v306
    %s1124 = scalar_lea.vmem [#allocation6], 1
    %v1125 = vld [vmem:[%s1124] sm:$0x1]
    %s1126 = scalar_lea.vmem [#allocation7], 1
    %v1127 = vld [vmem:[%s1126] sm:$0x1]
    %v1128 = vsel %vm318, %v1122, 0.0
    %1129 = vadd.xlane.f32.xlu0 %v1128
    %v1130 = vpop.xlane.xlu0 %1129
    %v1131 = vsel %vm318, %v1123, 0.0
    %1132 = vadd.xlane.f32.xlu0 %v1131
    %v1133 = vpop.xlane.xlu0 %1132
    %v1134 = vmul.f32 %v1130, %v331
    %v1135 = vmul.f32 %v1133, %v331
    %v1136 = vsub.f32 %v1122, %v1134
    %v1137 = vsub.f32 %v1123, %v1135
    %v1138 = vmul.f32 %v1136, %v1136
    %v1139 = vmul.f32 %v1137, %v1137
    %v1140 = vsel %vm318, %v1138, 0.0
    %1141 = vadd.xlane.f32.xlu0 %v1140
    %v1142 = vpop.xlane.xlu0 %1141
    %v1143 = vsel %vm318, %v1139, 0.0
    %1144 = vadd.xlane.f32.xlu0 %v1143
    %v1145 = vpop.xlane.xlu0 %1144
    %v1146 = vmul.f32 %v1142, %v331
    %v1147 = vmul.f32 %v1145, %v331
    %v1148 = vadd.f32 %v1146, 1e-08
    %v1149 = vadd.f32 %v1147, 1e-08
    %v1150 = vrsqrt.pop %v1148
    %v1151 = vmul.f32 %v1150, %v1148
    %v1152 = vmul.f32 %v1151, %v1150
    %v1153 = vmul.f32 0.5, %v1152
    %v1154 = vsub.f32 1.5, %v1153
    %v1155 = vmul.f32 %v1150, %v1154
    %vm1156 = vweird.f32 %v1148
    %vm1157 = vweird.f32 %v1150
    %vm1158 = vmor %vm1156, %vm1157
    %v1159 = vsel %vm1158, %v1150, %v1155
    %v1160 = vrsqrt.pop %v1149
    %v1161 = vmul.f32 %v1160, %v1149
    %v1162 = vmul.f32 %v1161, %v1160
    %v1163 = vmul.f32 0.5, %v1162
    %v1164 = vsub.f32 1.5, %v1163
    %v1165 = vmul.f32 %v1160, %v1164
    %vm1166 = vweird.f32 %v1149
    %vm1167 = vweird.f32 %v1160
    %vm1168 = vmor %vm1166, %vm1167
    %v1169 = vsel %vm1168, %v1160, %v1165
    %v1170 = vmul.f32 %v1136, %v1159
    %v1171 = vmul.f32 %v1137, %v1169
    %v1173 = vperm.slane %v1125, 0
    %v1175 = vmul.f32 %v1170, %v1173
    %v1176 = vmul.f32 %v1171, %v1173
    %v1178 = vperm.slane %v1127, 0
    %v1180 = vadd.f32 %v1175, %v1178
    %v1181 = vadd.f32 %v1176, %v1178
    %v1182 = vpack.c.bf16 %v1181, %v1180
    %s1183 = scalar_lea.vmem [#allocation9], 16
    %v1184 = vld [vmem:[%s1183] sm:$0xf]
    %v1185 = vld [vmem:[%s1183 + $0x4] sm:$0xf]
    %v1186 = vld [vmem:[%s1183 + $0x8] sm:$0xf]
    %v1187 = vld [vmem:[%s1183 + $0xc] sm:$0xf]
    %s1188 = scalar_lea.vmem [#allocation10], 1
    %v1189 = vld [vmem:[%s1188] sm:$0x1]
    %v1191 = vperm.slane %v1189, 0
    %v1197 = vunpack.c.l.b16 %v1184
    %v1198 = vunpack.c.l.b16 %v1185
    %v1199 = vunpack.c.l.b16 %v1186
    %v1200 = vunpack.c.l.b16 %v1187
    %v1201 = vpack.c.b16 %v1198, %v1197
    %v1202 = vpack.c.b16 %v1200, %v1199
    %v1206 = vsel %vm318, %v1182, 0
    %1208 = vmatpush.bf16.msra.mxu0 0
    %1209 = vmatpush.bf16.msra.mxu0 0
    %1210 = vmatpush.bf16.msra.mxu0 0
    %1211 = vmatpush.bf16.msra.mxu0 0
    %1212 = vmatpush.bf16.msra.mxu0 0
    %1213 = vmatpush.bf16.msra.mxu0 0
    %1214 = vmatpush.bf16.msra.mxu0 %v1202
    %1215 = vmatpush.bf16.msra.mxu0 %v1201
    %1216 = vmatmul.bf16.gmra.mxu0 %v1206
    %v1217 = vpop.f32.mrf.mxu0
    %v1218 = vadd.f32 %v1191, %v1217
    %v1219 = vpop.f32.mrf.mxu0
    %v1220 = vadd.f32 %v1191, %v1219
    %1221 = vdwg.mxu0
    %v1222 = vpack.c.bf16 %v1123, %v1122
    %s1223 = scalar_lea.vmem [#allocation12], 16
    %v1224 = vld [vmem:[%s1223] sm:$0xf]
    %v1225 = vld [vmem:[%s1223 + $0x4] sm:$0xf]
    %v1226 = vld [vmem:[%s1223 + $0x8] sm:$0xf]
    %v1227 = vld [vmem:[%s1223 + $0xc] sm:$0xf]
    %s1228 = scalar_lea.vmem [#allocation13], 1
    %v1229 = vld [vmem:[%s1228] sm:$0x1]
    %v1231 = vperm.slane %v1229, 0
    %v1237 = vunpack.c.l.b16 %v1224
    %v1238 = vunpack.c.l.b16 %v1225
    %v1239 = vunpack.c.l.b16 %v1226
    %v1240 = vunpack.c.l.b16 %v1227
    %v1241 = vpack.c.b16 %v1238, %v1237
    %v1242 = vpack.c.b16 %v1240, %v1239
    %v1246 = vsel %vm318, %v1222, 0
    %1248 = vmatpush.bf16.msra.mxu0 0
    %1249 = vmatpush.bf16.msra.mxu0 0
    %1250 = vmatpush.bf16.msra.mxu0 0
    %1251 = vmatpush.bf16.msra.mxu0 0
    %1252 = vmatpush.bf16.msra.mxu0 0
    %1253 = vmatpush.bf16.msra.mxu0 0
    %1254 = vmatpush.bf16.msra.mxu0 %v1242
    %1255 = vmatpush.bf16.msra.mxu0 %v1241
    %1256 = vmatmul.bf16.gmra.mxu0 %v1246
    %v1257 = vpop.f32.mrf.mxu0
    %v1258 = vadd.f32 %v1231, %v1257
    %v1259 = vpop.f32.mrf.mxu0
    %v1260 = vadd.f32 %v1231, %v1259
    %1261 = vdwg.mxu0
    %v1262 = vpack.c.bf16 %v1218, %v1218
    %v1263 = vpack.c.bf16 %v1220, %v1220
    %v1264 = vpack.c.bf16 %v1258, %v1258
    %v1265 = vpack.c.bf16 %v1260, %v1260
    %v1267 = vsel %vm460, %v1262, 0
    %v1270 = vsel %vm460, %v1264, 0
    %1272 = vmatpush.bf16.xpose.msra.mxu0 0
    %1273 = vmatpush.bf16.xpose.msra.mxu0 0
    %1274 = vmatpush.bf16.xpose.msra.mxu0 0
    %1275 = vmatpush.bf16.xpose.msra.mxu0 0
    %1276 = vmatpush.bf16.xpose.msra.mxu0 0
    %1277 = vmatpush.bf16.xpose.msra.mxu0 0
    %1278 = vmatpush.bf16.xpose.msra.mxu0 0
    %1279 = vmatpush.bf16.xpose.msra.mxu0 %v1270
    %1280 = vmatmul.bf16.gmra.mxu0 %v1267
    %v1281 = vpop.f32.mrf.mxu0
    %v1282 = vadd.f32 %v315, %v1281
    %v1283 = vpop.f32.mrf.mxu0
    %1284 = vdwg.mxu0
    %v1286 = vsel %vm460, %v1263, 0
    %v1289 = vsel %vm460, %v1265, 0
    %1291 = vmatpush.bf16.xpose.msra.mxu0 0
    %1292 = vmatpush.bf16.xpose.msra.mxu0 0
    %1293 = vmatpush.bf16.xpose.msra.mxu0 0
    %1294 = vmatpush.bf16.xpose.msra.mxu0 0
    %1295 = vmatpush.bf16.xpose.msra.mxu0 0
    %1296 = vmatpush.bf16.xpose.msra.mxu0 0
    %1297 = vmatpush.bf16.xpose.msra.mxu0 0
    %1298 = vmatpush.bf16.xpose.msra.mxu0 %v1289
    %1299 = vmatmul.bf16.gmra.mxu0 %v1286
    %v1300 = vpop.f32.mrf.mxu0
    %v1301 = vadd.f32 %v315, %v1300
    %v1302 = vpop.f32.mrf.mxu0
    %1303 = vdwg.mxu0
    %v1304 = vsel %vm460, %v1282, -inf
    %1305 = vmax.xlane.f32.xlu0 %v1304
    %v1306 = vpop.xlane.xlu0 %1305
    %v1307 = vsel %vm460, %v1301, -inf
    %1308 = vmax.xlane.f32.xlu0 %v1307
    %v1309 = vpop.xlane.xlu0 %1308
    %v1310 = vsub.f32 %v1282, %v1306
    %v1311 = vsub.f32 %v1301, %v1309
    %v1312 = vmul.f32 %v1310, 1.442695
    %v1313 = vpow.pop %v1312
    %v1314 = vmul.f32 %v1311, 1.442695
    %v1315 = vpow.pop %v1314
    %v1316 = vsel %vm460, %v1313, 0.0
    %1317 = vadd.xlane.f32.xlu0 %v1316
    %v1318 = vpop.xlane.xlu0 %1317
    %v1319 = vsel %vm460, %v1315, 0.0
    %1320 = vadd.xlane.f32.xlu0 %v1319
    %v1321 = vpop.xlane.xlu0 %1320
    %v1322 = vrcp.pop %v1318
    %v1323 = vrcp.pop %v1321
    %v1324 = vmul.f32 %v1313, %v1322
    %v1325 = vmul.f32 %v1315, %v1323
    %v1326 = vpack.c.bf16 %v1324, %v1324
    %v1327 = vpack.c.bf16 %v1325, %v1325
    %v1329 = vunpack.c.l.b16 %v1264
    %v1330 = vpack.c.b16 %v1329, %v1329
    %1331 = vrot.lane.b32.xlu0 %v1330, 96
    %v1332 = vpop.permute.xlu0 %1331
    %v1334 = vsel %vm460, %v1326, 0
    %v1337 = vsel %vm531, %v1332, 0
    %1339 = vmatpush.bf16.msra.mxu0 0
    %1340 = vmatpush.bf16.msra.mxu0 0
    %1341 = vmatpush.bf16.msra.mxu0 0
    %1342 = vmatpush.bf16.msra.mxu0 0
    %1343 = vmatpush.bf16.msra.mxu0 0
    %1344 = vmatpush.bf16.msra.mxu0 0
    %1345 = vmatpush.bf16.msra.mxu0 0
    %1346 = vmatpush.bf16.msra.mxu0 %v1337
    %1347 = vmatmul.bf16.gmra.mxu0 %v1334
    %v1348 = vpop.f32.mrf.mxu0
    %v1349 = vadd.f32 0.0, %v1348
    %v1350 = vpop.f32.mrf.mxu0
    %1351 = vdwg.mxu0
    %v1353 = vunpack.c.l.b16 %v1265
    %v1354 = vpack.c.b16 %v1353, %v1353
    %1355 = vrot.lane.b32.xlu0 %v1354, 96
    %v1356 = vpop.permute.xlu0 %1355
    %v1358 = vsel %vm460, %v1327, 0
    %v1361 = vsel %vm531, %v1356, 0
    %1363 = vmatpush.bf16.msra.mxu0 0
    %1364 = vmatpush.bf16.msra.mxu0 0
    %1365 = vmatpush.bf16.msra.mxu0 0
    %1366 = vmatpush.bf16.msra.mxu0 0
    %1367 = vmatpush.bf16.msra.mxu0 0
    %1368 = vmatpush.bf16.msra.mxu0 0
    %1369 = vmatpush.bf16.msra.mxu0 0
    %1370 = vmatpush.bf16.msra.mxu0 %v1361
    %1371 = vmatmul.bf16.gmra.mxu0 %v1358
    %v1372 = vpop.f32.mrf.mxu0
    %v1373 = vadd.f32 0.0, %v1372
    %v1374 = vpop.f32.mrf.mxu0
    %1375 = vdwg.mxu0
    %v1377 = vunpack.c.l.b16 %v1262
    %v1378 = vpack.c.b16 %v1377, %v1377
    %1379 = vrot.lane.b32.xlu0 %v1378, 120
    %v1380 = vpop.permute.xlu0 %1379
    %1381 = vrot.lane.b32.xlu0 %v1330, 120
    %v1382 = vpop.permute.xlu0 %1381
    %v1384 = vsel %vm460, %v1380, 0
    %v1387 = vsel %vm460, %v1382, 0
    %1389 = vmatpush.bf16.xpose.msra.mxu0 0
    %1390 = vmatpush.bf16.xpose.msra.mxu0 0
    %1391 = vmatpush.bf16.xpose.msra.mxu0 0
    %1392 = vmatpush.bf16.xpose.msra.mxu0 0
    %1393 = vmatpush.bf16.xpose.msra.mxu0 0
    %1394 = vmatpush.bf16.xpose.msra.mxu0 0
    %1395 = vmatpush.bf16.xpose.msra.mxu0 0
    %1396 = vmatpush.bf16.xpose.msra.mxu0 %v1387
    %1397 = vmatmul.bf16.gmra.mxu0 %v1384
    %v1398 = vpop.f32.mrf.mxu0
    %v1399 = vadd.f32 %v315, %v1398
    %v1400 = vpop.f32.mrf.mxu0
    %1401 = vdwg.mxu0
    %v1403 = vunpack.c.l.b16 %v1263
    %v1404 = vpack.c.b16 %v1403, %v1403
    %1405 = vrot.lane.b32.xlu0 %v1404, 120
    %v1406 = vpop.permute.xlu0 %1405
    %1407 = vrot.lane.b32.xlu0 %v1354, 120
    %v1408 = vpop.permute.xlu0 %1407
    %v1410 = vsel %vm460, %v1406, 0
    %v1413 = vsel %vm460, %v1408, 0
    %1415 = vmatpush.bf16.xpose.msra.mxu0 0
    %1416 = vmatpush.bf16.xpose.msra.mxu0 0
    %1417 = vmatpush.bf16.xpose.msra.mxu0 0
    %1418 = vmatpush.bf16.xpose.msra.mxu0 0
    %1419 = vmatpush.bf16.xpose.msra.mxu0 0
    %1420 = vmatpush.bf16.xpose.msra.mxu0 0
    %1421 = vmatpush.bf16.xpose.msra.mxu0 0
    %1422 = vmatpush.bf16.xpose.msra.mxu0 %v1413
    %1423 = vmatmul.bf16.gmra.mxu0 %v1410
    %v1424 = vpop.f32.mrf.mxu0
    %v1425 = vadd.f32 %v315, %v1424
    %v1426 = vpop.f32.mrf.mxu0
    %1427 = vdwg.mxu0
    %v1428 = vsel %vm460, %v1399, -inf
    %1429 = vmax.xlane.f32.xlu0 %v1428
    %v1430 = vpop.xlane.xlu0 %1429
    %v1431 = vsel %vm460, %v1425, -inf
    %1432 = vmax.xlane.f32.xlu0 %v1431
    %v1433 = vpop.xlane.xlu0 %1432
    %v1434 = vsub.f32 %v1399, %v1430
    %v1435 = vsub.f32 %v1425, %v1433
    %v1436 = vmul.f32 %v1434, 1.442695
    %v1437 = vpow.pop %v1436
    %v1438 = vmul.f32 %v1435, 1.442695
    %v1439 = vpow.pop %v1438
    %v1440 = vsel %vm460, %v1437, 0.0
    %1441 = vadd.xlane.f32.xlu0 %v1440
    %v1442 = vpop.xlane.xlu0 %1441
    %v1443 = vsel %vm460, %v1439, 0.0
    %1444 = vadd.xlane.f32.xlu0 %v1443
    %v1445 = vpop.xlane.xlu0 %1444
    %v1446 = vrcp.pop %v1442
    %v1447 = vrcp.pop %v1445
    %v1448 = vmul.f32 %v1437, %v1446
    %v1449 = vmul.f32 %v1439, %v1447
    %v1450 = vpack.c.bf16 %v1448, %v1448
    %v1451 = vpack.c.bf16 %v1449, %v1449
    %1452 = vrot.lane.b32.xlu0 %v1330, 88
    %v1453 = vpop.permute.xlu0 %1452
    %v1455 = vsel %vm460, %v1450, 0
    %v1458 = vsel %vm531, %v1453, 0
    %1460 = vmatpush.bf16.msra.mxu0 0
    %1461 = vmatpush.bf16.msra.mxu0 0
    %1462 = vmatpush.bf16.msra.mxu0 0
    %1463 = vmatpush.bf16.msra.mxu0 0
    %1464 = vmatpush.bf16.msra.mxu0 0
    %1465 = vmatpush.bf16.msra.mxu0 0
    %1466 = vmatpush.bf16.msra.mxu0 0
    %1467 = vmatpush.bf16.msra.mxu0 %v1458
    %1468 = vmatmul.bf16.gmra.mxu0 %v1455
    %v1469 = vpop.f32.mrf.mxu0
    %v1470 = vadd.f32 0.0, %v1469
    %v1471 = vpop.f32.mrf.mxu0
    %1472 = vdwg.mxu0
    %1473 = vrot.lane.b32.xlu0 %v1354, 88
    %v1474 = vpop.permute.xlu0 %1473
    %v1476 = vsel %vm460, %v1451, 0
    %v1479 = vsel %vm531, %v1474, 0
    %1481 = vmatpush.bf16.msra.mxu0 0
    %1482 = vmatpush.bf16.msra.mxu0 0
    %1483 = vmatpush.bf16.msra.mxu0 0
    %1484 = vmatpush.bf16.msra.mxu0 0
    %1485 = vmatpush.bf16.msra.mxu0 0
    %1486 = vmatpush.bf16.msra.mxu0 0
    %1487 = vmatpush.bf16.msra.mxu0 0
    %1488 = vmatpush.bf16.msra.mxu0 %v1479
    %1489 = vmatmul.bf16.gmra.mxu0 %v1476
    %v1490 = vpop.f32.mrf.mxu0
    %v1491 = vadd.f32 0.0, %v1490
    %v1492 = vpop.f32.mrf.mxu0
    %1493 = vdwg.mxu0
    %1494 = vrot.lane.b32.xlu0 %v1378, 112
    %v1495 = vpop.permute.xlu0 %1494
    %1496 = vrot.lane.b32.xlu0 %v1330, 112
    %v1497 = vpop.permute.xlu0 %1496
    %v1499 = vsel %vm460, %v1495, 0
    %v1502 = vsel %vm460, %v1497, 0
    %1504 = vmatpush.bf16.xpose.msra.mxu0 0
    %1505 = vmatpush.bf16.xpose.msra.mxu0 0
    %1506 = vmatpush.bf16.xpose.msra.mxu0 0
    %1507 = vmatpush.bf16.xpose.msra.mxu0 0
    %1508 = vmatpush.bf16.xpose.msra.mxu0 0
    %1509 = vmatpush.bf16.xpose.msra.mxu0 0
    %1510 = vmatpush.bf16.xpose.msra.mxu0 0
    %1511 = vmatpush.bf16.xpose.msra.mxu0 %v1502
    %1512 = vmatmul.bf16.gmra.mxu0 %v1499
    %v1513 = vpop.f32.mrf.mxu0
    %v1514 = vadd.f32 %v315, %v1513
    %v1515 = vpop.f32.mrf.mxu0
    %1516 = vdwg.mxu0
    %1517 = vrot.lane.b32.xlu0 %v1404, 112
    %v1518 = vpop.permute.xlu0 %1517
    %1519 = vrot.lane.b32.xlu0 %v1354, 112
    %v1520 = vpop.permute.xlu0 %1519
    %v1522 = vsel %vm460, %v1518, 0
    %v1525 = vsel %vm460, %v1520, 0
    %1527 = vmatpush.bf16.xpose.msra.mxu0 0
    %1528 = vmatpush.bf16.xpose.msra.mxu0 0
    %1529 = vmatpush.bf16.xpose.msra.mxu0 0
    %1530 = vmatpush.bf16.xpose.msra.mxu0 0
    %1531 = vmatpush.bf16.xpose.msra.mxu0 0
    %1532 = vmatpush.bf16.xpose.msra.mxu0 0
    %1533 = vmatpush.bf16.xpose.msra.mxu0 0
    %1534 = vmatpush.bf16.xpose.msra.mxu0 %v1525
    %1535 = vmatmul.bf16.gmra.mxu0 %v1522
    %v1536 = vpop.f32.mrf.mxu0
    %v1537 = vadd.f32 %v315, %v1536
    %v1538 = vpop.f32.mrf.mxu0
    %1539 = vdwg.mxu0
    %v1540 = vsel %vm460, %v1514, -inf
    %1541 = vmax.xlane.f32.xlu0 %v1540
    %v1542 = vpop.xlane.xlu0 %1541
    %v1543 = vsel %vm460, %v1537, -inf
    %1544 = vmax.xlane.f32.xlu0 %v1543
    %v1545 = vpop.xlane.xlu0 %1544
    %v1546 = vsub.f32 %v1514, %v1542
    %v1547 = vsub.f32 %v1537, %v1545
    %v1548 = vmul.f32 %v1546, 1.442695
    %v1549 = vpow.pop %v1548
    %v1550 = vmul.f32 %v1547, 1.442695
    %v1551 = vpow.pop %v1550
    %v1552 = vsel %vm460, %v1549, 0.0
    %1553 = vadd.xlane.f32.xlu0 %v1552
    %v1554 = vpop.xlane.xlu0 %1553
    %v1555 = vsel %vm460, %v1551, 0.0
    %1556 = vadd.xlane.f32.xlu0 %v1555
    %v1557 = vpop.xlane.xlu0 %1556
    %v1558 = vrcp.pop %v1554
    %v1559 = vrcp.pop %v1557
    %v1560 = vmul.f32 %v1549, %v1558
    %v1561 = vmul.f32 %v1551, %v1559
    %v1562 = vpack.c.bf16 %v1560, %v1560
    %v1563 = vpack.c.bf16 %v1561, %v1561
    %1564 = vrot.lane.b32.xlu0 %v1330, 80
    %v1565 = vpop.permute.xlu0 %1564
    %v1567 = vsel %vm460, %v1562, 0
    %v1570 = vsel %vm531, %v1565, 0
    %1572 = vmatpush.bf16.msra.mxu0 0
    %1573 = vmatpush.bf16.msra.mxu0 0
    %1574 = vmatpush.bf16.msra.mxu0 0
    %1575 = vmatpush.bf16.msra.mxu0 0
    %1576 = vmatpush.bf16.msra.mxu0 0
    %1577 = vmatpush.bf16.msra.mxu0 0
    %1578 = vmatpush.bf16.msra.mxu0 0
    %1579 = vmatpush.bf16.msra.mxu0 %v1570
    %1580 = vmatmul.bf16.gmra.mxu0 %v1567
    %v1581 = vpop.f32.mrf.mxu0
    %v1582 = vadd.f32 0.0, %v1581
    %v1583 = vpop.f32.mrf.mxu0
    %1584 = vdwg.mxu0
    %1585 = vrot.lane.b32.xlu0 %v1354, 80
    %v1586 = vpop.permute.xlu0 %1585
    %v1588 = vsel %vm460, %v1563, 0
    %v1591 = vsel %vm531, %v1586, 0
    %1593 = vmatpush.bf16.msra.mxu0 0
    %1594 = vmatpush.bf16.msra.mxu0 0
    %1595 = vmatpush.bf16.msra.mxu0 0
    %1596 = vmatpush.bf16.msra.mxu0 0
    %1597 = vmatpush.bf16.msra.mxu0 0
    %1598 = vmatpush.bf16.msra.mxu0 0
    %1599 = vmatpush.bf16.msra.mxu0 0
    %1600 = vmatpush.bf16.msra.mxu0 %v1591
    %1601 = vmatmul.bf16.gmra.mxu0 %v1588
    %v1602 = vpop.f32.mrf.mxu0
    %v1603 = vadd.f32 0.0, %v1602
    %v1604 = vpop.f32.mrf.mxu0
    %1605 = vdwg.mxu0
    %1606 = vrot.lane.b32.xlu0 %v1378, 104
    %v1607 = vpop.permute.xlu0 %1606
    %1608 = vrot.lane.b32.xlu0 %v1330, 104
    %v1609 = vpop.permute.xlu0 %1608
    %v1611 = vsel %vm460, %v1607, 0
    %v1614 = vsel %vm460, %v1609, 0
    %1616 = vmatpush.bf16.xpose.msra.mxu0 0
    %1617 = vmatpush.bf16.xpose.msra.mxu0 0
    %1618 = vmatpush.bf16.xpose.msra.mxu0 0
    %1619 = vmatpush.bf16.xpose.msra.mxu0 0
    %1620 = vmatpush.bf16.xpose.msra.mxu0 0
    %1621 = vmatpush.bf16.xpose.msra.mxu0 0
    %1622 = vmatpush.bf16.xpose.msra.mxu0 0
    %1623 = vmatpush.bf16.xpose.msra.mxu0 %v1614
    %1624 = vmatmul.bf16.gmra.mxu0 %v1611
    %v1625 = vpop.f32.mrf.mxu0
    %v1626 = vadd.f32 %v315, %v1625
    %v1627 = vpop.f32.mrf.mxu0
    %1628 = vdwg.mxu0
    %1629 = vrot.lane.b32.xlu0 %v1404, 104
    %v1630 = vpop.permute.xlu0 %1629
    %1631 = vrot.lane.b32.xlu0 %v1354, 104
    %v1632 = vpop.permute.xlu0 %1631
    %v1634 = vsel %vm460, %v1630, 0
    %v1637 = vsel %vm460, %v1632, 0
    %1639 = vmatpush.bf16.xpose.msra.mxu0 0
    %1640 = vmatpush.bf16.xpose.msra.mxu0 0
    %1641 = vmatpush.bf16.xpose.msra.mxu0 0
    %1642 = vmatpush.bf16.xpose.msra.mxu0 0
    %1643 = vmatpush.bf16.xpose.msra.mxu0 0
    %1644 = vmatpush.bf16.xpose.msra.mxu0 0
    %1645 = vmatpush.bf16.xpose.msra.mxu0 0
    %1646 = vmatpush.bf16.xpose.msra.mxu0 %v1637
    %1647 = vmatmul.bf16.gmra.mxu0 %v1634
    %v1648 = vpop.f32.mrf.mxu0
    %v1649 = vadd.f32 %v315, %v1648
    %v1650 = vpop.f32.mrf.mxu0
    %1651 = vdwg.mxu0
    %v1652 = vsel %vm460, %v1626, -inf
    %1653 = vmax.xlane.f32.xlu0 %v1652
    %v1654 = vpop.xlane.xlu0 %1653
    %v1655 = vsel %vm460, %v1649, -inf
    %1656 = vmax.xlane.f32.xlu0 %v1655
    %v1657 = vpop.xlane.xlu0 %1656
    %v1658 = vsub.f32 %v1626, %v1654
    %v1659 = vsub.f32 %v1649, %v1657
    %v1660 = vmul.f32 %v1658, 1.442695
    %v1661 = vpow.pop %v1660
    %v1662 = vmul.f32 %v1659, 1.442695
    %v1663 = vpow.pop %v1662
    %v1664 = vsel %vm460, %v1661, 0.0
    %1665 = vadd.xlane.f32.xlu0 %v1664
    %v1666 = vpop.xlane.xlu0 %1665
    %v1667 = vsel %vm460, %v1663, 0.0
    %1668 = vadd.xlane.f32.xlu0 %v1667
    %v1669 = vpop.xlane.xlu0 %1668
    %v1670 = vrcp.pop %v1666
    %v1671 = vrcp.pop %v1669
    %v1672 = vmul.f32 %v1661, %v1670
    %v1673 = vmul.f32 %v1663, %v1671
    %v1674 = vpack.c.bf16 %v1672, %v1672
    %v1675 = vpack.c.bf16 %v1673, %v1673
    %1676 = vrot.lane.b32.xlu0 %v1330, 72
    %v1677 = vpop.permute.xlu0 %1676
    %v1679 = vsel %vm460, %v1674, 0
    %v1682 = vsel %vm531, %v1677, 0
    %1684 = vmatpush.bf16.msra.mxu0 0
    %1685 = vmatpush.bf16.msra.mxu0 0
    %1686 = vmatpush.bf16.msra.mxu0 0
    %1687 = vmatpush.bf16.msra.mxu0 0
    %1688 = vmatpush.bf16.msra.mxu0 0
    %1689 = vmatpush.bf16.msra.mxu0 0
    %1690 = vmatpush.bf16.msra.mxu0 0
    %1691 = vmatpush.bf16.msra.mxu0 %v1682
    %1692 = vmatmul.bf16.gmra.mxu0 %v1679
    %v1693 = vpop.f32.mrf.mxu0
    %v1694 = vadd.f32 0.0, %v1693
    %v1695 = vpop.f32.mrf.mxu0
    %1696 = vdwg.mxu0
    %1697 = vrot.lane.b32.xlu0 %v1354, 72
    %v1698 = vpop.permute.xlu0 %1697
    %v1700 = vsel %vm460, %v1675, 0
    %v1703 = vsel %vm531, %v1698, 0
    %1705 = vmatpush.bf16.msra.mxu0 0
    %1706 = vmatpush.bf16.msra.mxu0 0
    %1707 = vmatpush.bf16.msra.mxu0 0
    %1708 = vmatpush.bf16.msra.mxu0 0
    %1709 = vmatpush.bf16.msra.mxu0 0
    %1710 = vmatpush.bf16.msra.mxu0 0
    %1711 = vmatpush.bf16.msra.mxu0 0
    %1712 = vmatpush.bf16.msra.mxu0 %v1703
    %1713 = vmatmul.bf16.gmra.mxu0 %v1700
    %v1714 = vpop.f32.mrf.mxu0
    %v1715 = vadd.f32 0.0, %v1714
    %v1716 = vpop.f32.mrf.mxu0
    %1717 = vdwg.mxu0
    %1720 = vrot.lane.b32.xlu0 %v1470, 8
    %v1721 = vpop.permute.xlu0 %1720
    %1722 = vrot.lane.b32.xlu0 %v1491, 8
    %v1723 = vpop.permute.xlu0 %1722
    %1728 = vrot.lane.b32.xlu0 %v1582, 16
    %v1729 = vpop.permute.xlu0 %1728
    %1730 = vrot.lane.b32.xlu0 %v1603, 16
    %v1731 = vpop.permute.xlu0 %1730
    %1736 = vrot.lane.b32.xlu0 %v1694, 24
    %v1737 = vpop.permute.xlu0 %1736
    %1738 = vrot.lane.b32.xlu0 %v1715, 24
    %v1739 = vpop.permute.xlu0 %1738
    %v1742 = vsel %vm460, %v1349, %v1721
    %v1743 = vsel %vm460, %v1373, %v1723
    %v1744 = vsel %vm940, %v1742, %v1729
    %v1745 = vsel %vm940, %v1743, %v1731
    %v1746 = vsel %vm943, %v1744, %v1737
    %v1747 = vsel %vm943, %v1745, %v1739
    %v1748 = vpack.c.bf16 %v1747, %v1746
    %s1749 = scalar_lea.vmem [#allocation15], 16
    %v1750 = vld [vmem:[%s1749] sm:$0xf]
    %v1751 = vld [vmem:[%s1749 + $0x4] sm:$0xf]
    %v1752 = vld [vmem:[%s1749 + $0x8] sm:$0xf]
    %v1753 = vld [vmem:[%s1749 + $0xc] sm:$0xf]
    %s1754 = scalar_lea.vmem [#allocation16], 1
    %v1755 = vld [vmem:[%s1754] sm:$0x1]
    %v1757 = vperm.slane %v1755, 0
    %v1763 = vunpack.c.l.b16 %v1750
    %v1764 = vunpack.c.l.b16 %v1751
    %v1765 = vunpack.c.l.b16 %v1752
    %v1766 = vunpack.c.l.b16 %v1753
    %v1767 = vpack.c.b16 %v1764, %v1763
    %v1768 = vpack.c.b16 %v1766, %v1765
    %v1772 = vsel %vm318, %v1748, 0
    %1774 = vmatpush.bf16.msra.mxu0 0
    %1775 = vmatpush.bf16.msra.mxu0 0
    %1776 = vmatpush.bf16.msra.mxu0 0
    %1777 = vmatpush.bf16.msra.mxu0 0
    %1778 = vmatpush.bf16.msra.mxu0 0
    %1779 = vmatpush.bf16.msra.mxu0 0
    %1780 = vmatpush.bf16.msra.mxu0 %v1768
    %1781 = vmatpush.bf16.msra.mxu0 %v1767
    %1782 = vmatmul.bf16.gmra.mxu0 %v1772
    %v1783 = vpop.f32.mrf.mxu0
    %v1784 = vadd.f32 %v1757, %v1783
    %v1785 = vpop.f32.mrf.mxu0
    %v1786 = vadd.f32 %v1757, %v1785
    %1787 = vdwg.mxu0
    %v1788 = vadd.f32 %v1180, %v1784
    %v1789 = vadd.f32 %v1181, %v1786
    %s1790 = scalar_lea.vmem [#allocation18], 1
    %v1791 = vld [vmem:[%s1790] sm:$0x1]
    %s1792 = scalar_lea.vmem [#allocation19], 1
    %v1793 = vld [vmem:[%s1792] sm:$0x1]
    %v1794 = vsel %vm318, %v1788, 0.0
    %1795 = vadd.xlane.f32.xlu0 %v1794
    %v1796 = vpop.xlane.xlu0 %1795
    %v1797 = vsel %vm318, %v1789, 0.0
    %1798 = vadd.xlane.f32.xlu0 %v1797
    %v1799 = vpop.xlane.xlu0 %1798
    %v1800 = vmul.f32 %v1796, %v331
    %v1801 = vmul.f32 %v1799, %v331
    %v1802 = vsub.f32 %v1788, %v1800
    %v1803 = vsub.f32 %v1789, %v1801
    %v1804 = vmul.f32 %v1802, %v1802
    %v1805 = vmul.f32 %v1803, %v1803
    %v1806 = vsel %vm318, %v1804, 0.0
    %1807 = vadd.xlane.f32.xlu0 %v1806
    %v1808 = vpop.xlane.xlu0 %1807
    %v1809 = vsel %vm318, %v1805, 0.0
    %1810 = vadd.xlane.f32.xlu0 %v1809
    %v1811 = vpop.xlane.xlu0 %1810
    %v1812 = vmul.f32 %v1808, %v331
    %v1813 = vmul.f32 %v1811, %v331
    %v1814 = vadd.f32 %v1812, 1e-08
    %v1815 = vadd.f32 %v1813, 1e-08
    %v1816 = vrsqrt.pop %v1814
    %v1817 = vmul.f32 %v1816, %v1814
    %v1818 = vmul.f32 %v1817, %v1816
    %v1819 = vmul.f32 0.5, %v1818
    %v1820 = vsub.f32 1.5, %v1819
    %v1821 = vmul.f32 %v1816, %v1820
    %vm1822 = vweird.f32 %v1814
    %vm1823 = vweird.f32 %v1816
    %vm1824 = vmor %vm1822, %vm1823
    %v1825 = vsel %vm1824, %v1816, %v1821
    %v1826 = vrsqrt.pop %v1815
    %v1827 = vmul.f32 %v1826, %v1815
    %v1828 = vmul.f32 %v1827, %v1826
    %v1829 = vmul.f32 0.5, %v1828
    %v1830 = vsub.f32 1.5, %v1829
    %v1831 = vmul.f32 %v1826, %v1830
    %vm1832 = vweird.f32 %v1815
    %vm1833 = vweird.f32 %v1826
    %vm1834 = vmor %vm1832, %vm1833
    %v1835 = vsel %vm1834, %v1826, %v1831
    %v1836 = vmul.f32 %v1802, %v1825
    %v1837 = vmul.f32 %v1803, %v1835
    %v1839 = vperm.slane %v1791, 0
    %v1841 = vmul.f32 %v1836, %v1839
    %v1842 = vmul.f32 %v1837, %v1839
    %v1844 = vperm.slane %v1793, 0
    %v1846 = vadd.f32 %v1841, %v1844
    %v1847 = vadd.f32 %v1842, %v1844
    %v1848 = vpack.c.bf16 %v1847, %v1846
    %s1849 = scalar_lea.vmem [#allocation21], 16
    %v1850 = vld [vmem:[%s1849] sm:$0xf]
    %v1851 = vld [vmem:[%s1849 + $0x4] sm:$0xf]
    %v1852 = vld [vmem:[%s1849 + $0x8] sm:$0xf]
    %v1853 = vld [vmem:[%s1849 + $0xc] sm:$0xf]
    %s1854 = scalar_lea.vmem [#allocation22], 1
    %v1855 = vld [vmem:[%s1854] sm:$0x1]
    %v1857 = vperm.slane %v1855, 0
    %v1863 = vunpack.c.l.b16 %v1850
    %v1864 = vunpack.c.l.b16 %v1851
    %v1865 = vunpack.c.l.b16 %v1852
    %v1866 = vunpack.c.l.b16 %v1853
    %v1867 = vpack.c.b16 %v1864, %v1863
    %v1868 = vpack.c.b16 %v1866, %v1865
    %v1872 = vsel %vm318, %v1848, 0
    %1874 = vmatpush.bf16.msra.mxu0 0
    %1875 = vmatpush.bf16.msra.mxu0 0
    %1876 = vmatpush.bf16.msra.mxu0 0
    %1877 = vmatpush.bf16.msra.mxu0 0
    %1878 = vmatpush.bf16.msra.mxu0 0
    %1879 = vmatpush.bf16.msra.mxu0 0
    %1880 = vmatpush.bf16.msra.mxu0 %v1868
    %1881 = vmatpush.bf16.msra.mxu0 %v1867
    %1882 = vmatmul.bf16.gmra.mxu0 %v1872
    %v1883 = vpop.f32.mrf.mxu0
    %v1884 = vadd.f32 %v1857, %v1883
    %v1885 = vpop.f32.mrf.mxu0
    %v1886 = vadd.f32 %v1857, %v1885
    %1887 = vdwg.mxu0
    %v1888 = vmax.f32 %v1884, 0.0
    %v1889 = vmax.f32 %v1886, 0.0
    %v1890 = vpack.c.bf16 %v1889, %v1888
    %s1891 = scalar_lea.vmem %s15, 16
    %v1892 = vld [vmem:[%s1891] sm:$0xf]
    %v1893 = vld [vmem:[%s1891 + $0x4] sm:$0xf]
    %v1894 = vld [vmem:[%s1891 + $0x8] sm:$0xf]
    %v1895 = vld [vmem:[%s1891 + $0xc] sm:$0xf]
    %s1896 = scalar_lea.vmem [#allocation24], 1
    %v1897 = vld [vmem:[%s1896] sm:$0x1]
    %v1899 = vperm.slane %v1897, 0
    %v1905 = vunpack.c.l.b16 %v1892
    %v1906 = vunpack.c.l.b16 %v1893
    %v1907 = vunpack.c.l.b16 %v1894
    %v1908 = vunpack.c.l.b16 %v1895
    %v1909 = vpack.c.b16 %v1906, %v1905
    %v1910 = vpack.c.b16 %v1908, %v1907
    %v1914 = vsel %vm318, %v1890, 0
    %1916 = vmatpush.bf16.msra.mxu0 0
    %1917 = vmatpush.bf16.msra.mxu0 0
    %1918 = vmatpush.bf16.msra.mxu0 0
    %1919 = vmatpush.bf16.msra.mxu0 0
    %1920 = vmatpush.bf16.msra.mxu0 0
    %1921 = vmatpush.bf16.msra.mxu0 0
    %1922 = vmatpush.bf16.msra.mxu0 %v1910
    %1923 = vmatpush.bf16.msra.mxu0 %v1909
    %1924 = vmatmul.bf16.gmra.mxu0 %v1914
    %v1925 = vpop.f32.mrf.mxu0
    %v1926 = vadd.f32 %v1899, %v1925
    %v1927 = vpop.f32.mrf.mxu0
    %v1928 = vadd.f32 %v1899, %v1927
    %1929 = vdwg.mxu0
    %v1930 = vadd.f32 %v1846, %v1926
    %v1931 = vadd.f32 %v1847, %v1928
    %v1932 = vmul.f32 %v1930, %v301
    %v1933 = vmul.f32 %v1931, %v306
    %v1934 = vld [vmem:[%s17] sm:$0x1]
    %v1935 = vld [vmem:[%s18] sm:$0x1]
    %v1936 = vsel %vm318, %v1932, 0.0
    %1937 = vadd.xlane.f32.xlu0 %v1936
    %v1938 = vpop.xlane.xlu0 %1937
    %v1939 = vsel %vm318, %v1933, 0.0
    %1940 = vadd.xlane.f32.xlu0 %v1939
    %v1941 = vpop.xlane.xlu0 %1940
    %v1942 = vmul.f32 %v1938, %v331
    %v1943 = vmul.f32 %v1941, %v331
    %v1944 = vsub.f32 %v1932, %v1942
    %v1945 = vsub.f32 %v1933, %v1943
    %v1946 = vmul.f32 %v1944, %v1944
    %v1947 = vmul.f32 %v1945, %v1945
    %v1948 = vsel %vm318, %v1946, 0.0
    %1949 = vadd.xlane.f32.xlu0 %v1948
    %v1950 = vpop.xlane.xlu0 %1949
    %v1951 = vsel %vm318, %v1947, 0.0
    %1952 = vadd.xlane.f32.xlu0 %v1951
    %v1953 = vpop.xlane.xlu0 %1952
    %v1954 = vmul.f32 %v1950, %v331
    %v1955 = vmul.f32 %v1953, %v331
    %v1956 = vadd.f32 %v1954, 1e-08
    %v1957 = vadd.f32 %v1955, 1e-08
    %v1958 = vrsqrt.pop %v1956
    %v1959 = vmul.f32 %v1958, %v1956
    %v1960 = vmul.f32 %v1959, %v1958
    %v1961 = vmul.f32 0.5, %v1960
    %v1962 = vsub.f32 1.5, %v1961
    %v1963 = vmul.f32 %v1958, %v1962
    %vm1964 = vweird.f32 %v1956
    %vm1965 = vweird.f32 %v1958
    %vm1966 = vmor %vm1964, %vm1965
    %v1967 = vsel %vm1966, %v1958, %v1963
    %v1968 = vrsqrt.pop %v1957
    %v1969 = vmul.f32 %v1968, %v1957
    %v1970 = vmul.f32 %v1969, %v1968
    %v1971 = vmul.f32 0.5, %v1970
    %v1972 = vsub.f32 1.5, %v1971
    %v1973 = vmul.f32 %v1968, %v1972
    %vm1974 = vweird.f32 %v1957
    %vm1975 = vweird.f32 %v1968
    %vm1976 = vmor %vm1974, %vm1975
    %v1977 = vsel %vm1976, %v1968, %v1973
    %v1978 = vmul.f32 %v1944, %v1967
    %v1979 = vmul.f32 %v1945, %v1977
    %v1981 = vperm.slane %v1934, 0
    %v1983 = vmul.f32 %v1978, %v1981
    %v1984 = vmul.f32 %v1979, %v1981
    %v1986 = vperm.slane %v1935, 0
    %v1988 = vadd.f32 %v1983, %v1986
    %v1989 = vadd.f32 %v1984, %v1986
    %v1990 = vmul.f32 %v1988, %v301
    %v1991 = vmul.f32 %v1989, %v306
    %v1992 = vsel %vm318, %v1990, 0.0
    %v1993 = vrot.slane %v1992, 4
    %v1994 = vadd.f32 %v1992, %v1993
    %v1995 = vrot.slane %v1994, 2
    %v1996 = vadd.f32 %v1994, %v1995
    %v1997 = vrot.slane %v1996, 1
    %v1998 = vadd.f32 %v1996, %v1997
    %v1999 = vsel %vm318, %v1991, 0.0
    %v2000 = vrot.slane %v1999, 4
    %v2001 = vadd.f32 %v1999, %v2000
    %v2002 = vrot.slane %v2001, 2
    %v2003 = vadd.f32 %v2001, %v2002
    %v2004 = vrot.slane %v2003, 1
    %v2005 = vadd.f32 %v2003, %v2004
    %vm2006 = vcmask 7168
    %v2007 = vsel %vm2006, %v294, 0.0
    %v2008 = vrot.slane %v2007, 4
    %v2009 = vadd.f32 %v2007, %v2008
    %v2010 = vrot.slane %v2009, 2
    %v2011 = vadd.f32 %v2009, %v2010
    %v2012 = vrot.slane %v2011, 1
    %v2013 = vadd.f32 %v2011, %v2012
    %v2014 = vsel %vm2006, %v295, 0.0
    %v2015 = vrot.slane %v2014, 4
    %v2016 = vadd.f32 %v2014, %v2015
    %v2017 = vrot.slane %v2016, 2
    %v2018 = vadd.f32 %v2016, %v2017
    %v2019 = vrot.slane %v2018, 1
    %v2020 = vadd.f32 %v2018, %v2019
    %2022 = vset.pattern.permute.xlu0 0
    %2023 = vperm.xlu0 %2022, %v2013
    %v2024 = vpop.permute.xlu0 %2023
    %2027 = vset.pattern.permute.xlu0 0
    %2028 = vperm.xlu0 %2027, %v2020
    %v2029 = vpop.permute.xlu0 %2028
    %v2031 = vrcp.pop %v2024
    %v2032 = vmul.f32 %v2024, %v2031
    %v2033 = vsub.f32 1.0, %v2032
    %v2034 = vmul.f32 %v2031, %v2033
    %v2035 = vadd.f32 %v2031, %v2034
    %vm2036 = vweird.f32 %v2024
    %vm2037 = vweird.f32 %v2031
    %vm2038 = vmor %vm2036, %vm2037
    %v2039 = vsel %vm2038, %v2031, %v2035
    %v2040 = vand.u32 2147483647, %v2024
    %vm2041 = vcmp.eq.f32.partialorder %v2040, 8.507059e+37
    %v2042 = vand.u32 %v2024, 2147483648
    %v2043 = vor.u32 1.1754944e-38, %v2042
    %v2044 = vsel %vm2041, %v2043, %v2039
    %v2045 = vmul.f32 %v1998, %v2044
    %v2046 = vrcp.pop %v2029
    %v2047 = vmul.f32 %v2029, %v2046
    %v2048 = vsub.f32 1.0, %v2047
    %v2049 = vmul.f32 %v2046, %v2048
    %v2050 = vadd.f32 %v2046, %v2049
    %vm2051 = vweird.f32 %v2029
    %vm2052 = vweird.f32 %v2046
    %vm2053 = vmor %vm2051, %vm2052
    %v2054 = vsel %vm2053, %v2046, %v2050
    %v2055 = vand.u32 2147483647, %v2029
    %vm2056 = vcmp.eq.f32.partialorder %v2055, 8.507059e+37
    %v2057 = vand.u32 %v2029, 2147483648
    %v2058 = vor.u32 1.1754944e-38, %v2057
    %v2059 = vsel %vm2056, %v2058, %v2054
    %v2060 = vmul.f32 %v2005, %v2059
    %vm2061 = vcmp.ne.f32.partialorder %v2045, %v2045
    %vm2062 = vcmp.ne.f32.partialorder %v2060, %v2060
    %v2063 = vsel %vm2061, 0.0, %v2045
    %v2064 = vsel %vm2062, 0.0, %v2060
    %v2065 = vld [vmem:[#allocation4] sm:$0x3]
    %v2067 = vrot.slane %v2065, 1
    %v2070 = vmul.f32 %v2063, %v2065
    %v2071 = vmul.f32 %v2064, %v2067
    %v2074 = vrot.slane %v2071, 7
    %vm2075 = vcmask 1041409
    %v2076 = vsel %vm2075, %v2074, %v2070
    %vm2078 = vcmask 254976
    %v2079 = vsel %vm2078, %v2076, 0.0
    %2080 = vadd.xlane.f32.xlu0 %v2079
    %v2081 = vpop.xlane.xlu0 %2080
    %v2083 = vperm.slane %v2081, 0
    %v2084 = vperm.slane %v2081, 1
    %vm2087 = vcmask 0
    %2088 = vst.msk [vmem:[%s19] sm:$0x1] %vm2087, %v2083
    %2089 = vst.msk [vmem:[%s19 + $0x1] sm:$0x1] %vm2087, %v2084
    // Predicated region
    $region138: #{tpu_custom_call.1} parent=1 // pred_check
      _
    $region139: #{tpu_custom_call.1} parent=1 // pred_check_branch
      %2091 = sbr.rel (0) target = $region141
    $region140: #{tpu_custom_call.1} parent=1 // pred_region
      _
    $region141: #{tpu_custom_call.1} parent=1 // pred_fallthru
      _
    // Predicated region
    $region142: #{tpu_custom_call.1} parent=1 // pred_check
      _
    $region143: #{tpu_custom_call.1} parent=1 // pred_check_branch
      %2093 = sbr.rel (0) target = $region145
    $region144: #{tpu_custom_call.1} parent=1 // pred_region
      _
    $region145: #{tpu_custom_call.1} parent=1 // pred_fallthru
      _
    %2094 = vsyncpa [#allocation3], 1
    %2095 = vsyncpa [#allocation5], 1
    %2096 = vsyncpa [#allocation8], 1
    %2097 = vsyncpa [#allocation11], 1
    %2098 = vsyncpa [#allocation14], 1
    %2099 = vsyncpa [#allocation17], 1
    %2100 = vsyncpa [#allocation20], 1
    %2101 = vsyncpa [#allocation23], 1

</llo_original>
